<compile_context>
chip_gen: v7x
topology: tpu7x:2x2x1
jax: 0.10.0
libtpu: 0.0.40
codegen_flags: <defaults>
</compile_context>

<pallas_src>
import math
import jax
import jax.numpy as jnp
import numpy as np
from jax.experimental import pallas as pl
from jax.experimental.pallas import tpu as pltpu

LN_EPS = 1e-5


def _layernorm(x, gamma, beta):
    mu = x.mean(-1, keepdims=True)
    var = ((x - mu) ** 2).mean(-1, keepdims=True)
    return (x - mu) * jax.lax.rsqrt(var + LN_EPS) * gamma + beta


def _const_spec(shape):
    """Full-array block with a constant block index: DMA'd once, stays resident."""
    ndim = len(shape)
    return pl.BlockSpec(shape, lambda *_: (0,) * ndim)


# ---------------------------------------------------------------------------
# Fused encoder kernel (grid over batch tiles, megacore-parallel):
#   out[b, :n_num, :] = x_num[b, :, None] * (col_emb @ W^T) + num_bias @ W^T   (pure VPU)
#   out[b, n_num:, :] = LayerNorm(E[cat_ids[b]]) @ W^T                          (VMEM gather + MXU)
# ---------------------------------------------------------------------------
def encode_kernel(cat_ids_ref,        # (B_pad*s_cat,) int32  SMEM (scalar prefetch)
                  e_ref,              # (V, D) f32     VMEM-resident embedding table
                  xnum_ref,           # (tb, n_num) f32 VMEM (tiled per grid step)
                  colw_ref,           # (n_num, D) f32  == masked_mean(LN(E[num_ids])) @ W^T
                  biasw_ref,          # (1, D) f32      == num_bias @ W^T
                  gamma_ref, beta_ref,  # (1, D) f32    LayerNorm affine
                  wt_ref,             # (D, D) bf16     == W^T
                  out_ref,            # (tb, n_num + s_cat, D) f32
                  gbuf):              # (tb*s_cat, D) f32 scratch: gathered token rows
    i = pl.program_id(0)
    tb, n_tok, d = out_ref.shape
    n_num = colw_ref.shape[0]
    s_cat = n_tok - n_num
    n_rows = tb * s_cat
    v_max = e_ref.shape[0] - 1
    base = i * n_rows

    # ---- categorical gather: dynamic row loads from the VMEM-resident table ----
    def gather_row(r):
        tok = jnp.clip(cat_ids_ref[base + r], 0, v_max)       # clamp untrusted ids
        gbuf[pl.ds(r, 1), :] = e_ref[pl.ds(tok, 1), :]

    if n_rows <= 256:
        # short gather: fully unrolled -> static destination rows (dense stores),
        # only the source row index is dynamic.
        for r in range(n_rows):
            gather_row(r)
    else:
        @pl.loop(0, n_rows)
        def _(r):
            gather_row(r)

    # ---- categorical path: LayerNorm in f32 -> bf16 align matmul (f32 accumulate) ----
    emb = _layernorm(gbuf[...], gamma_ref[...], beta_ref[...])            # (n_rows, D) f32
    cat = jnp.dot(emb.astype(jnp.bfloat16), wt_ref[...],
                  preferred_element_type=jnp.float32)                     # MXU, (n_rows, D) f32
    cat = cat.reshape(tb, s_cat, d)

    # ---- numerical path: align matmul hoisted into colw/biasw -> pure VPU FMA ----
    num = (xnum_ref[...][:, :, None] * colw_ref[...][None, :, :]
           + biasw_ref[...][None, :, :])                                  # (tb, n_num, D) f32

    # ---- single full-block, lane-dense store of the fused concat output ----
    out_ref[...] = jnp.concatenate([num, cat], axis=1)


# ---------------------------------------------------------------------------
# Wrapper
# ---------------------------------------------------------------------------
def _choose_batch_tile(batch, requested):
    """Whole batch if it fits the request; otherwise a multiple-of-8 tile with the
    batch padded up to a multiple of the tile (never degrade to tb=1)."""
    if batch <= requested:
        return batch, batch
    tb = max(8, (requested // 8) * 8)
    b_pad = ((batch + tb - 1) // tb) * tb
    return tb, b_pad


def transtab_input_encoder(params, tokenized, *, batch_tile=64):
    """Returns {'embedding': (B, N_num + S_cat, D), 'attention_mask': (B, N_num + S_cat)}."""
    E = params["word_emb"].astype(jnp.float32)        # (V, D); cast to bf16 here on v7x if tight
    gamma = params["ln_gamma"]                        # (1, D)
    beta = params["ln_beta"]                          # (1, D)
    W = params["align_w"]                             # (D, D)
    num_bias = params["num_bias"]                     # (1, D)

    x_num = tokenized["x_num"].astype(jnp.float32)    # (B, N_num)
    num_ids = tokenized["num_col_input_ids"]          # (N_num, S_num)
    num_mask = tokenized["num_att_mask"].astype(jnp.float32)   # (N_num, S_num)
    cat_ids = tokenized["x_cat_input_ids"]            # (B, S_cat)
    cat_mask = tokenized["cat_att_mask"]              # (B, S_cat)

    B, n_num = x_num.shape
    s_cat = cat_ids.shape[1]
    V, D = E.shape

    # ---- batch-independent column-embedding path: tiny, plain JAX (ex "kernel A") ----
    col_raw = _layernorm(E[num_ids], gamma, beta)                         # (N_num, S_num, D)
    # NOTE: denominator clamp guards an all-padding column name (ref would produce inf/NaN).
    denom = jnp.maximum(num_mask.sum(1, keepdims=True), 1.0)
    col_emb = (col_raw * num_mask[..., None]).sum(1) / denom              # (N_num, D)
    col_emb_w = col_emb @ W.T                                             # align matmul hoisted
    bias_w = num_bias @ W.T                                               # (1, D)
    w_t = W.T.astype(jnp.bfloat16)                                        # bf16 MXU operand

    # ---- batch tiling (pad B instead of shrinking the tile) ----
    tb, b_pad = _choose_batch_tile(B, batch_tile)
    if b_pad != B:
        x_num = jnp.pad(x_num, ((0, b_pad - B), (0, 0)))
        cat_ids = jnp.pad(cat_ids, ((0, b_pad - B), (0, 0)))
    n_tok = n_num + s_cat

    embedding = pl.pallas_call(
        encode_kernel,
        out_shape=jax.ShapeDtypeStruct((b_pad, n_tok, D), jnp.float32),
        grid_spec=pltpu.PrefetchScalarGridSpec(
            num_scalar_prefetch=1,
            grid=(b_pad // tb,),
            in_specs=[
                _const_spec((V, D)),                                   # embedding table (resident)
                pl.BlockSpec((tb, n_num), lambda i, *_: (i, 0)),       # x_num tile (auto-pipelined)
                _const_spec((n_num, D)),                               # col_emb @ W^T
                _const_spec((1, D)),                                   # num_bias @ W^T
                _const_spec((1, D)),                                   # gamma
                _const_spec((1, D)),                                   # beta
                _const_spec((D, D)),                                   # W^T (bf16)
            ],
            out_specs=pl.BlockSpec((tb, n_tok, D), lambda i, *_: (i, 0, 0)),
            scratch_shapes=[pltpu.VMEM((tb * s_cat, D), jnp.float32)],
        ),
        compiler_params=pltpu.CompilerParams(
            dimension_semantics=("parallel",),       # batch tiles independent -> megacore split
            vmem_limit_bytes=64 * 1024 * 1024,
        ),
    )(cat_ids.reshape(-1).astype(jnp.int32), E, x_num,
      col_emb_w, bias_w, gamma, beta, w_t)

    embedding = embedding[:B]
    attention_mask = jnp.concatenate(
        [jnp.ones((B, n_num), jnp.float32), cat_mask.astype(jnp.float32)], axis=1)
    return {"embedding": embedding, "attention_mask": attention_mask}


# ---------------------------------------------------------------------------
# Pure-JAX f32 reference (mirrors the PyTorch forward) for a sanity check
# ---------------------------------------------------------------------------
def _reference(params, tok):
    E, gamma, beta, W, bias = (params["word_emb"], params["ln_gamma"],
                               params["ln_beta"], params["align_w"],
                               params["num_bias"])
    num_emb = _layernorm(E[tok["num_col_input_ids"]], gamma, beta)
    m = tok["num_att_mask"][..., None]
    col_emb = (num_emb * m).sum(1) / tok["num_att_mask"].sum(1, keepdims=True)
    num_feat = tok["x_num"][:, :, None] * col_emb[None] + bias[None]
    num_feat = num_feat @ W.T
    cat_feat = _layernorm(E[tok["x_cat_input_ids"]], gamma, beta) @ W.T
    emb = jnp.concatenate([num_feat, cat_feat], axis=1)
    msk = jnp.concatenate(
        [jnp.ones(tok["x_num"].shape, jnp.float32), tok["cat_att_mask"]], axis=1)
    return {"embedding": emb, "attention_mask": msk}


if __name__ == "__main__":
    # small but lane-aligned shapes (D = 128 is the TransTab default hidden_dim);
    # B=12 with batch_tile=8 exercises batch padding and a 2-step parallel grid.
    B, D, V = 12, 128, 512
    N_NUM, S_NUM, S_CAT = 4, 8, 8

    key = jax.random.PRNGKey(0)
    (k_emb, k_w, k_bias, k_g, k_b2,
     k_ids1, k_ids2, k_num, k_mask) = jax.random.split(key, 9)

    word_emb = jax.random.normal(k_emb, (V, D), jnp.float32)
    word_emb = word_emb.at[0].set(0.0)                      # padding_idx = 0
    ln_gamma = 1.0 + 0.1 * jax.random.normal(k_g, (1, D), jnp.float32)
    ln_beta = 0.1 * jax.random.normal(k_b2, (1, D), jnp.float32)
    align_w = jax.random.normal(k_w, (D, D), jnp.float32) / math.sqrt(D)
    num_bias = jax.random.uniform(k_bias, (1, D), jnp.float32,
                                  minval=-1.0 / math.sqrt(D),
                                  maxval=1.0 / math.sqrt(D))
    params = dict(word_emb=word_emb, ln_gamma=ln_gamma, ln_beta=ln_beta,
                  align_w=align_w, num_bias=num_bias)

    # synthetic "tokenized" output of the feature extractor
    num_col_input_ids = jax.random.randint(k_ids1, (N_NUM, S_NUM), 1, V, jnp.int32)
    num_att_mask = (jax.random.uniform(k_mask, (N_NUM, S_NUM)) > 0.3).astype(jnp.float32)
    num_att_mask = num_att_mask.at[:, 0].set(1.0)           # at least one valid token per column
    x_num = jax.random.normal(k_num, (B, N_NUM), jnp.float32)
    x_cat_input_ids = jax.random.randint(k_ids2, (B, S_CAT), 0, V, jnp.int32)
    cat_att_mask = (x_cat_input_ids != 0).astype(jnp.float32)

    tokenized = dict(x_num=x_num, num_col_input_ids=num_col_input_ids,
                     num_att_mask=num_att_mask, x_cat_input_ids=x_cat_input_ids,
                     cat_att_mask=cat_att_mask)

    out = jax.block_until_ready(
        transtab_input_encoder(params, tokenized, batch_tile=8))
    ref = _reference(params, tokenized)

    # categorical path uses a bf16 MXU matmul (f32 accumulate) -> loosened tolerance vs f32 ref
    np.testing.assert_allclose(np.asarray(out["embedding"]),
                               np.asarray(ref["embedding"]), rtol=3e-2, atol=3e-2)
    np.testing.assert_allclose(np.asarray(out["attention_mask"]),
                               np.asarray(ref["attention_mask"]))
    print("KERNEL_OK")
</pallas_src>

<mosaic_0001>
module attributes {stable_mosaic.version = 11 : i64} {
  func.func @encode_kernel(%arg0: i32, %arg1: memref<128xi32, #tpu.memory_space<smem>>, %arg2: memref<512x128xf32, #tpu.memory_space<vmem>>, %arg3: memref<8x4xf32, #tpu.memory_space<vmem>>, %arg4: memref<4x128xf32, #tpu.memory_space<vmem>>, %arg5: memref<1x128xf32, #tpu.memory_space<vmem>>, %arg6: memref<1x128xf32, #tpu.memory_space<vmem>>, %arg7: memref<1x128xf32, #tpu.memory_space<vmem>>, %arg8: memref<128x128xbf16, #tpu.memory_space<vmem>>, %arg9: memref<8x12x128xf32, #tpu.memory_space<vmem>>, %arg10: memref<64x128xf32, #tpu.memory_space<vmem>>) attributes {dimension_semantics = [#tpu.dimension_semantics<parallel>], iteration_bounds = array<i64: 2>, scalar_prefetch = 1 : i64, scratch_operands = 1 : i64, tpu.core_type = #tpu.core_type<tc>, window_params = [{pipeline_mode = #tpu.pipeline_mode<synchronous>, transform_indices = @transform_0, window_bounds = array<i64: 512, 128>}, {transform_indices = @transform_1, window_bounds = array<i64: 8, 4>}, {pipeline_mode = #tpu.pipeline_mode<synchronous>, transform_indices = @transform_2, window_bounds = array<i64: 4, 128>}, {pipeline_mode = #tpu.pipeline_mode<synchronous>, transform_indices = @transform_3, window_bounds = array<i64: 1, 128>}, {pipeline_mode = #tpu.pipeline_mode<synchronous>, transform_indices = @transform_4, window_bounds = array<i64: 1, 128>}, {pipeline_mode = #tpu.pipeline_mode<synchronous>, transform_indices = @transform_5, window_bounds = array<i64: 1, 128>}, {pipeline_mode = #tpu.pipeline_mode<synchronous>, transform_indices = @transform_6, window_bounds = array<i64: 128, 128>}, {transform_indices = @transform_7, window_bounds = array<i64: 8, 12, 128>}]} {
    %c64_i32 = arith.constant 64 : i32
    %0 = arith.muli %arg0, %c64_i32 : i32
    %c0_i32 = arith.constant 0 : i32
    %1 = arith.addi %0, %c0_i32 : i32
    %2 = arith.index_cast %1 : i32 to index
    %3 = memref.load %arg1[%2] : memref<128xi32, #tpu.memory_space<smem>>
    %c0_i32_0 = arith.constant 0 : i32
    %c511_i32 = arith.constant 511 : i32
    %4 = arith.maxsi %c0_i32_0, %3 : i32
    %5 = arith.minsi %c511_i32, %4 : i32
    %6 = arith.index_cast %5 : i32 to index
    %c0 = arith.constant 0 : index
    %7 = vector.load %arg2[%6, %c0] : memref<512x128xf32, #tpu.memory_space<vmem>>, vector<1x128xf32>
    %c0_1 = arith.constant 0 : index
    %c0_2 = arith.constant 0 : index
    %8 = vector.load %arg10[%c0_1, %c0_2] : memref<64x128xf32, #tpu.memory_space<vmem>>, vector<1x128xf32>
    tpu.vector_store %arg10[%c0_1, %c0_2], %7 {strides = array<i32>} : memref<64x128xf32, #tpu.memory_space<vmem>>, vector<1x128xf32>,
    %c1_i32 = arith.constant 1 : i32
    %9 = arith.addi %0, %c1_i32 : i32
    %10 = arith.index_cast %9 : i32 to index
    %11 = memref.load %arg1[%10] : memref<128xi32, #tpu.memory_space<smem>>
    %c0_i32_3 = arith.constant 0 : i32
    %c511_i32_4 = arith.constant 511 : i32
    %12 = arith.maxsi %c0_i32_3, %11 : i32
    %13 = arith.minsi %c511_i32_4, %12 : i32
    %14 = arith.index_cast %13 : i32 to index
    %c0_5 = arith.constant 0 : index
    %15 = vector.load %arg2[%14, %c0_5] : memref<512x128xf32, #tpu.memory_space<vmem>>, vector<1x128xf32>
    %c1 = arith.constant 1 : index
    %c0_6 = arith.constant 0 : index
    %16 = vector.load %arg10[%c1, %c0_6] : memref<64x128xf32, #tpu.memory_space<vmem>>, vector<1x128xf32>
    tpu.vector_store %arg10[%c1, %c0_6], %15 {strides = array<i32>} : memref<64x128xf32, #tpu.memory_space<vmem>>, vector<1x128xf32>,
    %c2_i32 = arith.constant 2 : i32
    %17 = arith.addi %0, %c2_i32 : i32
    %18 = arith.index_cast %17 : i32 to index
    %19 = memref.load %arg1[%18] : memref<128xi32, #tpu.memory_space<smem>>
    %c0_i32_7 = arith.constant 0 : i32
    %c511_i32_8 = arith.constant 511 : i32
    %20 = arith.maxsi %c0_i32_7, %19 : i32
    %21 = arith.minsi %c511_i32_8, %20 : i32
    %22 = arith.index_cast %21 : i32 to index
    %c0_9 = arith.constant 0 : index
    %23 = vector.load %arg2[%22, %c0_9] : memref<512x128xf32, #tpu.memory_space<vmem>>, vector<1x128xf32>
    %c2 = arith.constant 2 : index
    %c0_10 = arith.constant 0 : index
    %24 = vector.load %arg10[%c2, %c0_10] : memref<64x128xf32, #tpu.memory_space<vmem>>, vector<1x128xf32>
    tpu.vector_store %arg10[%c2, %c0_10], %23 {strides = array<i32>} : memref<64x128xf32, #tpu.memory_space<vmem>>, vector<1x128xf32>,
    %c3_i32 = arith.constant 3 : i32
    %25 = arith.addi %0, %c3_i32 : i32
    %26 = arith.index_cast %25 : i32 to index
    %27 = memref.load %arg1[%26] : memref<128xi32, #tpu.memory_space<smem>>
    %c0_i32_11 = arith.constant 0 : i32
    %c511_i32_12 = arith.constant 511 : i32
    %28 = arith.maxsi %c0_i32_11, %27 : i32
    %29 = arith.minsi %c511_i32_12, %28 : i32
    %30 = arith.index_cast %29 : i32 to index
    %c0_13 = arith.constant 0 : index
    %31 = vector.load %arg2[%30, %c0_13] : memref<512x128xf32, #tpu.memory_space<vmem>>, vector<1x128xf32>
    %c3 = arith.constant 3 : index
    %c0_14 = arith.constant 0 : index
    %32 = vector.load %arg10[%c3, %c0_14] : memref<64x128xf32, #tpu.memory_space<vmem>>, vector<1x128xf32>
    tpu.vector_store %arg10[%c3, %c0_14], %31 {strides = array<i32>} : memref<64x128xf32, #tpu.memory_space<vmem>>, vector<1x128xf32>,
    %c4_i32 = arith.constant 4 : i32
    %33 = arith.addi %0, %c4_i32 : i32
    %34 = arith.index_cast %33 : i32 to index
    %35 = memref.load %arg1[%34] : memref<128xi32, #tpu.memory_space<smem>>
    %c0_i32_15 = arith.constant 0 : i32
    %c511_i32_16 = arith.constant 511 : i32
    %36 = arith.maxsi %c0_i32_15, %35 : i32
    %37 = arith.minsi %c511_i32_16, %36 : i32
    %38 = arith.index_cast %37 : i32 to index
    %c0_17 = arith.constant 0 : index
    %39 = vector.load %arg2[%38, %c0_17] : memref<512x128xf32, #tpu.memory_space<vmem>>, vector<1x128xf32>
    %c4 = arith.constant 4 : index
    %c0_18 = arith.constant 0 : index
    %40 = vector.load %arg10[%c4, %c0_18] : memref<64x128xf32, #tpu.memory_space<vmem>>, vector<1x128xf32>
    tpu.vector_store %arg10[%c4, %c0_18], %39 {strides = array<i32>} : memref<64x128xf32, #tpu.memory_space<vmem>>, vector<1x128xf32>,
    %c5_i32 = arith.constant 5 : i32
    %41 = arith.addi %0, %c5_i32 : i32
    %42 = arith.index_cast %41 : i32 to index
    %43 = memref.load %arg1[%42] : memref<128xi32, #tpu.memory_space<smem>>
    %c0_i32_19 = arith.constant 0 : i32
    %c511_i32_20 = arith.constant 511 : i32
    %44 = arith.maxsi %c0_i32_19, %43 : i32
    %45 = arith.minsi %c511_i32_20, %44 : i32
    %46 = arith.index_cast %45 : i32 to index
    %c0_21 = arith.constant 0 : index
    %47 = vector.load %arg2[%46, %c0_21] : memref<512x128xf32, #tpu.memory_space<vmem>>, vector<1x128xf32>
    %c5 = arith.constant 5 : index
    %c0_22 = arith.constant 0 : index
    %48 = vector.load %arg10[%c5, %c0_22] : memref<64x128xf32, #tpu.memory_space<vmem>>, vector<1x128xf32>
    tpu.vector_store %arg10[%c5, %c0_22], %47 {strides = array<i32>} : memref<64x128xf32, #tpu.memory_space<vmem>>, vector<1x128xf32>,
    %c6_i32 = arith.constant 6 : i32
    %49 = arith.addi %0, %c6_i32 : i32
    %50 = arith.index_cast %49 : i32 to index
    %51 = memref.load %arg1[%50] : memref<128xi32, #tpu.memory_space<smem>>
    %c0_i32_23 = arith.constant 0 : i32
    %c511_i32_24 = arith.constant 511 : i32
    %52 = arith.maxsi %c0_i32_23, %51 : i32
    %53 = arith.minsi %c511_i32_24, %52 : i32
    %54 = arith.index_cast %53 : i32 to index
    %c0_25 = arith.constant 0 : index
    %55 = vector.load %arg2[%54, %c0_25] : memref<512x128xf32, #tpu.memory_space<vmem>>, vector<1x128xf32>
    %c6 = arith.constant 6 : index
    %c0_26 = arith.constant 0 : index
    %56 = vector.load %arg10[%c6, %c0_26] : memref<64x128xf32, #tpu.memory_space<vmem>>, vector<1x128xf32>
    tpu.vector_store %arg10[%c6, %c0_26], %55 {strides = array<i32>} : memref<64x128xf32, #tpu.memory_space<vmem>>, vector<1x128xf32>,
    %c7_i32 = arith.constant 7 : i32
    %57 = arith.addi %0, %c7_i32 : i32
    %58 = arith.index_cast %57 : i32 to index
    %59 = memref.load %arg1[%58] : memref<128xi32, #tpu.memory_space<smem>>
    %c0_i32_27 = arith.constant 0 : i32
    %c511_i32_28 = arith.constant 511 : i32
    %60 = arith.maxsi %c0_i32_27, %59 : i32
    %61 = arith.minsi %c511_i32_28, %60 : i32
    %62 = arith.index_cast %61 : i32 to index
    %c0_29 = arith.constant 0 : index
    %63 = vector.load %arg2[%62, %c0_29] : memref<512x128xf32, #tpu.memory_space<vmem>>, vector<1x128xf32>
    %c7 = arith.constant 7 : index
    %c0_30 = arith.constant 0 : index
    %64 = vector.load %arg10[%c7, %c0_30] : memref<64x128xf32, #tpu.memory_space<vmem>>, vector<1x128xf32>
    tpu.vector_store %arg10[%c7, %c0_30], %63 {strides = array<i32>} : memref<64x128xf32, #tpu.memory_space<vmem>>, vector<1x128xf32>,
    %c8_i32 = arith.constant 8 : i32
    %65 = arith.addi %0, %c8_i32 : i32
    %66 = arith.index_cast %65 : i32 to index
    %67 = memref.load %arg1[%66] : memref<128xi32, #tpu.memory_space<smem>>
    %c0_i32_31 = arith.constant 0 : i32
    %c511_i32_32 = arith.constant 511 : i32
    %68 = arith.maxsi %c0_i32_31, %67 : i32
    %69 = arith.minsi %c511_i32_32, %68 : i32
    %70 = arith.index_cast %69 : i32 to index
    %c0_33 = arith.constant 0 : index
    %71 = vector.load %arg2[%70, %c0_33] : memref<512x128xf32, #tpu.memory_space<vmem>>, vector<1x128xf32>
    %c8 = arith.constant 8 : index
    %c0_34 = arith.constant 0 : index
    %72 = vector.load %arg10[%c8, %c0_34] : memref<64x128xf32, #tpu.memory_space<vmem>>, vector<1x128xf32>
    tpu.vector_store %arg10[%c8, %c0_34], %71 {strides = array<i32>} : memref<64x128xf32, #tpu.memory_space<vmem>>, vector<1x128xf32>,
    %c9_i32 = arith.constant 9 : i32
    %73 = arith.addi %0, %c9_i32 : i32
    %74 = arith.index_cast %73 : i32 to index
    %75 = memref.load %arg1[%74] : memref<128xi32, #tpu.memory_space<smem>>
    %c0_i32_35 = arith.constant 0 : i32
    %c511_i32_36 = arith.constant 511 : i32
    %76 = arith.maxsi %c0_i32_35, %75 : i32
    %77 = arith.minsi %c511_i32_36, %76 : i32
    %78 = arith.index_cast %77 : i32 to index
    %c0_37 = arith.constant 0 : index
    %79 = vector.load %arg2[%78, %c0_37] : memref<512x128xf32, #tpu.memory_space<vmem>>, vector<1x128xf32>
    %c9 = arith.constant 9 : index
    %c0_38 = arith.constant 0 : index
    %80 = vector.load %arg10[%c9, %c0_38] : memref<64x128xf32, #tpu.memory_space<vmem>>, vector<1x128xf32>
    tpu.vector_store %arg10[%c9, %c0_38], %79 {strides = array<i32>} : memref<64x128xf32, #tpu.memory_space<vmem>>, vector<1x128xf32>,
    %c10_i32 = arith.constant 10 : i32
    %81 = arith.addi %0, %c10_i32 : i32
    %82 = arith.index_cast %81 : i32 to index
    %83 = memref.load %arg1[%82] : memref<128xi32, #tpu.memory_space<smem>>
    %c0_i32_39 = arith.constant 0 : i32
    %c511_i32_40 = arith.constant 511 : i32
    %84 = arith.maxsi %c0_i32_39, %83 : i32
    %85 = arith.minsi %c511_i32_40, %84 : i32
    %86 = arith.index_cast %85 : i32 to index
    %c0_41 = arith.constant 0 : index
    %87 = vector.load %arg2[%86, %c0_41] : memref<512x128xf32, #tpu.memory_space<vmem>>, vector<1x128xf32>
    %c10 = arith.constant 10 : index
    %c0_42 = arith.constant 0 : index
    %88 = vector.load %arg10[%c10, %c0_42] : memref<64x128xf32, #tpu.memory_space<vmem>>, vector<1x128xf32>
    tpu.vector_store %arg10[%c10, %c0_42], %87 {strides = array<i32>} : memref<64x128xf32, #tpu.memory_space<vmem>>, vector<1x128xf32>,
    %c11_i32 = arith.constant 11 : i32
    %89 = arith.addi %0, %c11_i32 : i32
    %90 = arith.index_cast %89 : i32 to index
    %91 = memref.load %arg1[%90] : memref<128xi32, #tpu.memory_space<smem>>
    %c0_i32_43 = arith.constant 0 : i32
    %c511_i32_44 = arith.constant 511 : i32
    %92 = arith.maxsi %c0_i32_43, %91 : i32
    %93 = arith.minsi %c511_i32_44, %92 : i32
    %94 = arith.index_cast %93 : i32 to index
    %c0_45 = arith.constant 0 : index
    %95 = vector.load %arg2[%94, %c0_45] : memref<512x128xf32, #tpu.memory_space<vmem>>, vector<1x128xf32>
    %c11 = arith.constant 11 : index
    %c0_46 = arith.constant 0 : index
    %96 = vector.load %arg10[%c11, %c0_46] : memref<64x128xf32, #tpu.memory_space<vmem>>, vector<1x128xf32>
    tpu.vector_store %arg10[%c11, %c0_46], %95 {strides = array<i32>} : memref<64x128xf32, #tpu.memory_space<vmem>>, vector<1x128xf32>,
    %c12_i32 = arith.constant 12 : i32
    %97 = arith.addi %0, %c12_i32 : i32
    %98 = arith.index_cast %97 : i32 to index
    %99 = memref.load %arg1[%98] : memref<128xi32, #tpu.memory_space<smem>>
    %c0_i32_47 = arith.constant 0 : i32
    %c511_i32_48 = arith.constant 511 : i32
    %100 = arith.maxsi %c0_i32_47, %99 : i32
    %101 = arith.minsi %c511_i32_48, %100 : i32
    %102 = arith.index_cast %101 : i32 to index
    %c0_49 = arith.constant 0 : index
    %103 = vector.load %arg2[%102, %c0_49] : memref<512x128xf32, #tpu.memory_space<vmem>>, vector<1x128xf32>
    %c12 = arith.constant 12 : index
    %c0_50 = arith.constant 0 : index
    %104 = vector.load %arg10[%c12, %c0_50] : memref<64x128xf32, #tpu.memory_space<vmem>>, vector<1x128xf32>
    tpu.vector_store %arg10[%c12, %c0_50], %103 {strides = array<i32>} : memref<64x128xf32, #tpu.memory_space<vmem>>, vector<1x128xf32>,
    %c13_i32 = arith.constant 13 : i32
    %105 = arith.addi %0, %c13_i32 : i32
    %106 = arith.index_cast %105 : i32 to index
    %107 = memref.load %arg1[%106] : memref<128xi32, #tpu.memory_space<smem>>
    %c0_i32_51 = arith.constant 0 : i32
    %c511_i32_52 = arith.constant 511 : i32
    %108 = arith.maxsi %c0_i32_51, %107 : i32
    %109 = arith.minsi %c511_i32_52, %108 : i32
    %110 = arith.index_cast %109 : i32 to index
    %c0_53 = arith.constant 0 : index
    %111 = vector.load %arg2[%110, %c0_53] : memref<512x128xf32, #tpu.memory_space<vmem>>, vector<1x128xf32>
    %c13 = arith.constant 13 : index
    %c0_54 = arith.constant 0 : index
    %112 = vector.load %arg10[%c13, %c0_54] : memref<64x128xf32, #tpu.memory_space<vmem>>, vector<1x128xf32>
    tpu.vector_store %arg10[%c13, %c0_54], %111 {strides = array<i32>} : memref<64x128xf32, #tpu.memory_space<vmem>>, vector<1x128xf32>,
    %c14_i32 = arith.constant 14 : i32
    %113 = arith.addi %0, %c14_i32 : i32
    %114 = arith.index_cast %113 : i32 to index
    %115 = memref.load %arg1[%114] : memref<128xi32, #tpu.memory_space<smem>>
    %c0_i32_55 = arith.constant 0 : i32
    %c511_i32_56 = arith.constant 511 : i32
    %116 = arith.maxsi %c0_i32_55, %115 : i32
    %117 = arith.minsi %c511_i32_56, %116 : i32
    %118 = arith.index_cast %117 : i32 to index
    %c0_57 = arith.constant 0 : index
    %119 = vector.load %arg2[%118, %c0_57] : memref<512x128xf32, #tpu.memory_space<vmem>>, vector<1x128xf32>
    %c14 = arith.constant 14 : index
    %c0_58 = arith.constant 0 : index
    %120 = vector.load %arg10[%c14, %c0_58] : memref<64x128xf32, #tpu.memory_space<vmem>>, vector<1x128xf32>
    tpu.vector_store %arg10[%c14, %c0_58], %119 {strides = array<i32>} : memref<64x128xf32, #tpu.memory_space<vmem>>, vector<1x128xf32>,
    %c15_i32 = arith.constant 15 : i32
    %121 = arith.addi %0, %c15_i32 : i32
    %122 = arith.index_cast %121 : i32 to index
    %123 = memref.load %arg1[%122] : memref<128xi32, #tpu.memory_space<smem>>
    %c0_i32_59 = arith.constant 0 : i32
    %c511_i32_60 = arith.constant 511 : i32
    %124 = arith.maxsi %c0_i32_59, %123 : i32
    %125 = arith.minsi %c511_i32_60, %124 : i32
    %126 = arith.index_cast %125 : i32 to index
    %c0_61 = arith.constant 0 : index
    %127 = vector.load %arg2[%126, %c0_61] : memref<512x128xf32, #tpu.memory_space<vmem>>, vector<1x128xf32>
    %c15 = arith.constant 15 : index
    %c0_62 = arith.constant 0 : index
    %128 = vector.load %arg10[%c15, %c0_62] : memref<64x128xf32, #tpu.memory_space<vmem>>, vector<1x128xf32>
    tpu.vector_store %arg10[%c15, %c0_62], %127 {strides = array<i32>} : memref<64x128xf32, #tpu.memory_space<vmem>>, vector<1x128xf32>,
    %c16_i32 = arith.constant 16 : i32
    %129 = arith.addi %0, %c16_i32 : i32
    %130 = arith.index_cast %129 : i32 to index
    %131 = memref.load %arg1[%130] : memref<128xi32, #tpu.memory_space<smem>>
    %c0_i32_63 = arith.constant 0 : i32
    %c511_i32_64 = arith.constant 511 : i32
    %132 = arith.maxsi %c0_i32_63, %131 : i32
    %133 = arith.minsi %c511_i32_64, %132 : i32
    %134 = arith.index_cast %133 : i32 to index
    %c0_65 = arith.constant 0 : index
    %135 = vector.load %arg2[%134, %c0_65] : memref<512x128xf32, #tpu.memory_space<vmem>>, vector<1x128xf32>
    %c16 = arith.constant 16 : index
    %c0_66 = arith.constant 0 : index
    %136 = vector.load %arg10[%c16, %c0_66] : memref<64x128xf32, #tpu.memory_space<vmem>>, vector<1x128xf32>
    tpu.vector_store %arg10[%c16, %c0_66], %135 {strides = array<i32>} : memref<64x128xf32, #tpu.memory_space<vmem>>, vector<1x128xf32>,
    %c17_i32 = arith.constant 17 : i32
    %137 = arith.addi %0, %c17_i32 : i32
    %138 = arith.index_cast %137 : i32 to index
    %139 = memref.load %arg1[%138] : memref<128xi32, #tpu.memory_space<smem>>
    %c0_i32_67 = arith.constant 0 : i32
    %c511_i32_68 = arith.constant 511 : i32
    %140 = arith.maxsi %c0_i32_67, %139 : i32
    %141 = arith.minsi %c511_i32_68, %140 : i32
    %142 = arith.index_cast %141 : i32 to index
    %c0_69 = arith.constant 0 : index
    %143 = vector.load %arg2[%142, %c0_69] : memref<512x128xf32, #tpu.memory_space<vmem>>, vector<1x128xf32>
    %c17 = arith.constant 17 : index
    %c0_70 = arith.constant 0 : index
    %144 = vector.load %arg10[%c17, %c0_70] : memref<64x128xf32, #tpu.memory_space<vmem>>, vector<1x128xf32>
    tpu.vector_store %arg10[%c17, %c0_70], %143 {strides = array<i32>} : memref<64x128xf32, #tpu.memory_space<vmem>>, vector<1x128xf32>,
    %c18_i32 = arith.constant 18 : i32
    %145 = arith.addi %0, %c18_i32 : i32
    %146 = arith.index_cast %145 : i32 to index
    %147 = memref.load %arg1[%146] : memref<128xi32, #tpu.memory_space<smem>>
    %c0_i32_71 = arith.constant 0 : i32
    %c511_i32_72 = arith.constant 511 : i32
    %148 = arith.maxsi %c0_i32_71, %147 : i32
    %149 = arith.minsi %c511_i32_72, %148 : i32
    %150 = arith.index_cast %149 : i32 to index
    %c0_73 = arith.constant 0 : index
    %151 = vector.load %arg2[%150, %c0_73] : memref<512x128xf32, #tpu.memory_space<vmem>>, vector<1x128xf32>
    %c18 = arith.constant 18 : index
    %c0_74 = arith.constant 0 : index
    %152 = vector.load %arg10[%c18, %c0_74] : memref<64x128xf32, #tpu.memory_space<vmem>>, vector<1x128xf32>
    tpu.vector_store %arg10[%c18, %c0_74], %151 {strides = array<i32>} : memref<64x128xf32, #tpu.memory_space<vmem>>, vector<1x128xf32>,
    %c19_i32 = arith.constant 19 : i32
    %153 = arith.addi %0, %c19_i32 : i32
    %154 = arith.index_cast %153 : i32 to index
    %155 = memref.load %arg1[%154] : memref<128xi32, #tpu.memory_space<smem>>
    %c0_i32_75 = arith.constant 0 : i32
    %c511_i32_76 = arith.constant 511 : i32
    %156 = arith.maxsi %c0_i32_75, %155 : i32
    %157 = arith.minsi %c511_i32_76, %156 : i32
    %158 = arith.index_cast %157 : i32 to index
    %c0_77 = arith.constant 0 : index
    %159 = vector.load %arg2[%158, %c0_77] : memref<512x128xf32, #tpu.memory_space<vmem>>, vector<1x128xf32>
    %c19 = arith.constant 19 : index
    %c0_78 = arith.constant 0 : index
    %160 = vector.load %arg10[%c19, %c0_78] : memref<64x128xf32, #tpu.memory_space<vmem>>, vector<1x128xf32>
    tpu.vector_store %arg10[%c19, %c0_78], %159 {strides = array<i32>} : memref<64x128xf32, #tpu.memory_space<vmem>>, vector<1x128xf32>,
    %c20_i32 = arith.constant 20 : i32
    %161 = arith.addi %0, %c20_i32 : i32
    %162 = arith.index_cast %161 : i32 to index
    %163 = memref.load %arg1[%162] : memref<128xi32, #tpu.memory_space<smem>>
    %c0_i32_79 = arith.constant 0 : i32
    %c511_i32_80 = arith.constant 511 : i32
    %164 = arith.maxsi %c0_i32_79, %163 : i32
    %165 = arith.minsi %c511_i32_80, %164 : i32
    %166 = arith.index_cast %165 : i32 to index
    %c0_81 = arith.constant 0 : index
    %167 = vector.load %arg2[%166, %c0_81] : memref<512x128xf32, #tpu.memory_space<vmem>>, vector<1x128xf32>
    %c20 = arith.constant 20 : index
    %c0_82 = arith.constant 0 : index
    %168 = vector.load %arg10[%c20, %c0_82] : memref<64x128xf32, #tpu.memory_space<vmem>>, vector<1x128xf32>
    tpu.vector_store %arg10[%c20, %c0_82], %167 {strides = array<i32>} : memref<64x128xf32, #tpu.memory_space<vmem>>, vector<1x128xf32>,
    %c21_i32 = arith.constant 21 : i32
    %169 = arith.addi %0, %c21_i32 : i32
    %170 = arith.index_cast %169 : i32 to index
    %171 = memref.load %arg1[%170] : memref<128xi32, #tpu.memory_space<smem>>
    %c0_i32_83 = arith.constant 0 : i32
    %c511_i32_84 = arith.constant 511 : i32
    %172 = arith.maxsi %c0_i32_83, %171 : i32
    %173 = arith.minsi %c511_i32_84, %172 : i32
    %174 = arith.index_cast %173 : i32 to index
    %c0_85 = arith.constant 0 : index
    %175 = vector.load %arg2[%174, %c0_85] : memref<512x128xf32, #tpu.memory_space<vmem>>, vector<1x128xf32>
    %c21 = arith.constant 21 : index
    %c0_86 = arith.constant 0 : index
    %176 = vector.load %arg10[%c21, %c0_86] : memref<64x128xf32, #tpu.memory_space<vmem>>, vector<1x128xf32>
    tpu.vector_store %arg10[%c21, %c0_86], %175 {strides = array<i32>} : memref<64x128xf32, #tpu.memory_space<vmem>>, vector<1x128xf32>,
    %c22_i32 = arith.constant 22 : i32
    %177 = arith.addi %0, %c22_i32 : i32
    %178 = arith.index_cast %177 : i32 to index
    %179 = memref.load %arg1[%178] : memref<128xi32, #tpu.memory_space<smem>>
    %c0_i32_87 = arith.constant 0 : i32
    %c511_i32_88 = arith.constant 511 : i32
    %180 = arith.maxsi %c0_i32_87, %179 : i32
    %181 = arith.minsi %c511_i32_88, %180 : i32
    %182 = arith.index_cast %181 : i32 to index
    %c0_89 = arith.constant 0 : index
    %183 = vector.load %arg2[%182, %c0_89] : memref<512x128xf32, #tpu.memory_space<vmem>>, vector<1x128xf32>
    %c22 = arith.constant 22 : index
    %c0_90 = arith.constant 0 : index
    %184 = vector.load %arg10[%c22, %c0_90] : memref<64x128xf32, #tpu.memory_space<vmem>>, vector<1x128xf32>
    tpu.vector_store %arg10[%c22, %c0_90], %183 {strides = array<i32>} : memref<64x128xf32, #tpu.memory_space<vmem>>, vector<1x128xf32>,
    %c23_i32 = arith.constant 23 : i32
    %185 = arith.addi %0, %c23_i32 : i32
    %186 = arith.index_cast %185 : i32 to index
    %187 = memref.load %arg1[%186] : memref<128xi32, #tpu.memory_space<smem>>
    %c0_i32_91 = arith.constant 0 : i32
    %c511_i32_92 = arith.constant 511 : i32
    %188 = arith.maxsi %c0_i32_91, %187 : i32
    %189 = arith.minsi %c511_i32_92, %188 : i32
    %190 = arith.index_cast %189 : i32 to index
    %c0_93 = arith.constant 0 : index
    %191 = vector.load %arg2[%190, %c0_93] : memref<512x128xf32, #tpu.memory_space<vmem>>, vector<1x128xf32>
    %c23 = arith.constant 23 : index
    %c0_94 = arith.constant 0 : index
    %192 = vector.load %arg10[%c23, %c0_94] : memref<64x128xf32, #tpu.memory_space<vmem>>, vector<1x128xf32>
    tpu.vector_store %arg10[%c23, %c0_94], %191 {strides = array<i32>} : memref<64x128xf32, #tpu.memory_space<vmem>>, vector<1x128xf32>,
    %c24_i32 = arith.constant 24 : i32
    %193 = arith.addi %0, %c24_i32 : i32
    %194 = arith.index_cast %193 : i32 to index
    %195 = memref.load %arg1[%194] : memref<128xi32, #tpu.memory_space<smem>>
    %c0_i32_95 = arith.constant 0 : i32
    %c511_i32_96 = arith.constant 511 : i32
    %196 = arith.maxsi %c0_i32_95, %195 : i32
    %197 = arith.minsi %c511_i32_96, %196 : i32
    %198 = arith.index_cast %197 : i32 to index
    %c0_97 = arith.constant 0 : index
    %199 = vector.load %arg2[%198, %c0_97] : memref<512x128xf32, #tpu.memory_space<vmem>>, vector<1x128xf32>
    %c24 = arith.constant 24 : index
    %c0_98 = arith.constant 0 : index
    %200 = vector.load %arg10[%c24, %c0_98] : memref<64x128xf32, #tpu.memory_space<vmem>>, vector<1x128xf32>
    tpu.vector_store %arg10[%c24, %c0_98], %199 {strides = array<i32>} : memref<64x128xf32, #tpu.memory_space<vmem>>, vector<1x128xf32>,
    %c25_i32 = arith.constant 25 : i32
    %201 = arith.addi %0, %c25_i32 : i32
    %202 = arith.index_cast %201 : i32 to index
    %203 = memref.load %arg1[%202] : memref<128xi32, #tpu.memory_space<smem>>
    %c0_i32_99 = arith.constant 0 : i32
    %c511_i32_100 = arith.constant 511 : i32
    %204 = arith.maxsi %c0_i32_99, %203 : i32
    %205 = arith.minsi %c511_i32_100, %204 : i32
    %206 = arith.index_cast %205 : i32 to index
    %c0_101 = arith.constant 0 : index
    %207 = vector.load %arg2[%206, %c0_101] : memref<512x128xf32, #tpu.memory_space<vmem>>, vector<1x128xf32>
    %c25 = arith.constant 25 : index
    %c0_102 = arith.constant 0 : index
    %208 = vector.load %arg10[%c25, %c0_102] : memref<64x128xf32, #tpu.memory_space<vmem>>, vector<1x128xf32>
    tpu.vector_store %arg10[%c25, %c0_102], %207 {strides = array<i32>} : memref<64x128xf32, #tpu.memory_space<vmem>>, vector<1x128xf32>,
    %c26_i32 = arith.constant 26 : i32
    %209 = arith.addi %0, %c26_i32 : i32
    %210 = arith.index_cast %209 : i32 to index
    %211 = memref.load %arg1[%210] : memref<128xi32, #tpu.memory_space<smem>>
    %c0_i32_103 = arith.constant 0 : i32
    %c511_i32_104 = arith.constant 511 : i32
    %212 = arith.maxsi %c0_i32_103, %211 : i32
    %213 = arith.minsi %c511_i32_104, %212 : i32
    %214 = arith.index_cast %213 : i32 to index
    %c0_105 = arith.constant 0 : index
    %215 = vector.load %arg2[%214, %c0_105] : memref<512x128xf32, #tpu.memory_space<vmem>>, vector<1x128xf32>
    %c26 = arith.constant 26 : index
    %c0_106 = arith.constant 0 : index
    %216 = vector.load %arg10[%c26, %c0_106] : memref<64x128xf32, #tpu.memory_space<vmem>>, vector<1x128xf32>
    tpu.vector_store %arg10[%c26, %c0_106], %215 {strides = array<i32>} : memref<64x128xf32, #tpu.memory_space<vmem>>, vector<1x128xf32>,
    %c27_i32 = arith.constant 27 : i32
    %217 = arith.addi %0, %c27_i32 : i32
    %218 = arith.index_cast %217 : i32 to index
    %219 = memref.load %arg1[%218] : memref<128xi32, #tpu.memory_space<smem>>
    %c0_i32_107 = arith.constant 0 : i32
    %c511_i32_108 = arith.constant 511 : i32
    %220 = arith.maxsi %c0_i32_107, %219 : i32
    %221 = arith.minsi %c511_i32_108, %220 : i32
    %222 = arith.index_cast %221 : i32 to index
    %c0_109 = arith.constant 0 : index
    %223 = vector.load %arg2[%222, %c0_109] : memref<512x128xf32, #tpu.memory_space<vmem>>, vector<1x128xf32>
    %c27 = arith.constant 27 : index
    %c0_110 = arith.constant 0 : index
    %224 = vector.load %arg10[%c27, %c0_110] : memref<64x128xf32, #tpu.memory_space<vmem>>, vector<1x128xf32>
    tpu.vector_store %arg10[%c27, %c0_110], %223 {strides = array<i32>} : memref<64x128xf32, #tpu.memory_space<vmem>>, vector<1x128xf32>,
    %c28_i32 = arith.constant 28 : i32
    %225 = arith.addi %0, %c28_i32 : i32
    %226 = arith.index_cast %225 : i32 to index
    %227 = memref.load %arg1[%226] : memref<128xi32, #tpu.memory_space<smem>>
    %c0_i32_111 = arith.constant 0 : i32
    %c511_i32_112 = arith.constant 511 : i32
    %228 = arith.maxsi %c0_i32_111, %227 : i32
    %229 = arith.minsi %c511_i32_112, %228 : i32
    %230 = arith.index_cast %229 : i32 to index
    %c0_113 = arith.constant 0 : index
    %231 = vector.load %arg2[%230, %c0_113] : memref<512x128xf32, #tpu.memory_space<vmem>>, vector<1x128xf32>
    %c28 = arith.constant 28 : index
    %c0_114 = arith.constant 0 : index
    %232 = vector.load %arg10[%c28, %c0_114] : memref<64x128xf32, #tpu.memory_space<vmem>>, vector<1x128xf32>
    tpu.vector_store %arg10[%c28, %c0_114], %231 {strides = array<i32>} : memref<64x128xf32, #tpu.memory_space<vmem>>, vector<1x128xf32>,
    %c29_i32 = arith.constant 29 : i32
    %233 = arith.addi %0, %c29_i32 : i32
    %234 = arith.index_cast %233 : i32 to index
    %235 = memref.load %arg1[%234] : memref<128xi32, #tpu.memory_space<smem>>
    %c0_i32_115 = arith.constant 0 : i32
    %c511_i32_116 = arith.constant 511 : i32
    %236 = arith.maxsi %c0_i32_115, %235 : i32
    %237 = arith.minsi %c511_i32_116, %236 : i32
    %238 = arith.index_cast %237 : i32 to index
    %c0_117 = arith.constant 0 : index
    %239 = vector.load %arg2[%238, %c0_117] : memref<512x128xf32, #tpu.memory_space<vmem>>, vector<1x128xf32>
    %c29 = arith.constant 29 : index
    %c0_118 = arith.constant 0 : index
    %240 = vector.load %arg10[%c29, %c0_118] : memref<64x128xf32, #tpu.memory_space<vmem>>, vector<1x128xf32>
    tpu.vector_store %arg10[%c29, %c0_118], %239 {strides = array<i32>} : memref<64x128xf32, #tpu.memory_space<vmem>>, vector<1x128xf32>,
    %c30_i32 = arith.constant 30 : i32
    %241 = arith.addi %0, %c30_i32 : i32
    %242 = arith.index_cast %241 : i32 to index
    %243 = memref.load %arg1[%242] : memref<128xi32, #tpu.memory_space<smem>>
    %c0_i32_119 = arith.constant 0 : i32
    %c511_i32_120 = arith.constant 511 : i32
    %244 = arith.maxsi %c0_i32_119, %243 : i32
    %245 = arith.minsi %c511_i32_120, %244 : i32
    %246 = arith.index_cast %245 : i32 to index
    %c0_121 = arith.constant 0 : index
    %247 = vector.load %arg2[%246, %c0_121] : memref<512x128xf32, #tpu.memory_space<vmem>>, vector<1x128xf32>
    %c30 = arith.constant 30 : index
    %c0_122 = arith.constant 0 : index
    %248 = vector.load %arg10[%c30, %c0_122] : memref<64x128xf32, #tpu.memory_space<vmem>>, vector<1x128xf32>
    tpu.vector_store %arg10[%c30, %c0_122], %247 {strides = array<i32>} : memref<64x128xf32, #tpu.memory_space<vmem>>, vector<1x128xf32>,
    %c31_i32 = arith.constant 31 : i32
    %249 = arith.addi %0, %c31_i32 : i32
    %250 = arith.index_cast %249 : i32 to index
    %251 = memref.load %arg1[%250] : memref<128xi32, #tpu.memory_space<smem>>
    %c0_i32_123 = arith.constant 0 : i32
    %c511_i32_124 = arith.constant 511 : i32
    %252 = arith.maxsi %c0_i32_123, %251 : i32
    %253 = arith.minsi %c511_i32_124, %252 : i32
    %254 = arith.index_cast %253 : i32 to index
    %c0_125 = arith.constant 0 : index
    %255 = vector.load %arg2[%254, %c0_125] : memref<512x128xf32, #tpu.memory_space<vmem>>, vector<1x128xf32>
    %c31 = arith.constant 31 : index
    %c0_126 = arith.constant 0 : index
    %256 = vector.load %arg10[%c31, %c0_126] : memref<64x128xf32, #tpu.memory_space<vmem>>, vector<1x128xf32>
    tpu.vector_store %arg10[%c31, %c0_126], %255 {strides = array<i32>} : memref<64x128xf32, #tpu.memory_space<vmem>>, vector<1x128xf32>,
    %c32_i32 = arith.constant 32 : i32
    %257 = arith.addi %0, %c32_i32 : i32
    %258 = arith.index_cast %257 : i32 to index
    %259 = memref.load %arg1[%258] : memref<128xi32, #tpu.memory_space<smem>>
    %c0_i32_127 = arith.constant 0 : i32
    %c511_i32_128 = arith.constant 511 : i32
    %260 = arith.maxsi %c0_i32_127, %259 : i32
    %261 = arith.minsi %c511_i32_128, %260 : i32
    %262 = arith.index_cast %261 : i32 to index
    %c0_129 = arith.constant 0 : index
    %263 = vector.load %arg2[%262, %c0_129] : memref<512x128xf32, #tpu.memory_space<vmem>>, vector<1x128xf32>
    %c32 = arith.constant 32 : index
    %c0_130 = arith.constant 0 : index
    %264 = vector.load %arg10[%c32, %c0_130] : memref<64x128xf32, #tpu.memory_space<vmem>>, vector<1x128xf32>
    tpu.vector_store %arg10[%c32, %c0_130], %263 {strides = array<i32>} : memref<64x128xf32, #tpu.memory_space<vmem>>, vector<1x128xf32>,
    %c33_i32 = arith.constant 33 : i32
    %265 = arith.addi %0, %c33_i32 : i32
    %266 = arith.index_cast %265 : i32 to index
    %267 = memref.load %arg1[%266] : memref<128xi32, #tpu.memory_space<smem>>
    %c0_i32_131 = arith.constant 0 : i32
    %c511_i32_132 = arith.constant 511 : i32
    %268 = arith.maxsi %c0_i32_131, %267 : i32
    %269 = arith.minsi %c511_i32_132, %268 : i32
    %270 = arith.index_cast %269 : i32 to index
    %c0_133 = arith.constant 0 : index
    %271 = vector.load %arg2[%270, %c0_133] : memref<512x128xf32, #tpu.memory_space<vmem>>, vector<1x128xf32>
    %c33 = arith.constant 33 : index
    %c0_134 = arith.constant 0 : index
    %272 = vector.load %arg10[%c33, %c0_134] : memref<64x128xf32, #tpu.memory_space<vmem>>, vector<1x128xf32>
    tpu.vector_store %arg10[%c33, %c0_134], %271 {strides = array<i32>} : memref<64x128xf32, #tpu.memory_space<vmem>>, vector<1x128xf32>,
    %c34_i32 = arith.constant 34 : i32
    %273 = arith.addi %0, %c34_i32 : i32
    %274 = arith.index_cast %273 : i32 to index
    %275 = memref.load %arg1[%274] : memref<128xi32, #tpu.memory_space<smem>>
    %c0_i32_135 = arith.constant 0 : i32
    %c511_i32_136 = arith.constant 511 : i32
    %276 = arith.maxsi %c0_i32_135, %275 : i32
    %277 = arith.minsi %c511_i32_136, %276 : i32
    %278 = arith.index_cast %277 : i32 to index
    %c0_137 = arith.constant 0 : index
    %279 = vector.load %arg2[%278, %c0_137] : memref<512x128xf32, #tpu.memory_space<vmem>>, vector<1x128xf32>
    %c34 = arith.constant 34 : index
    %c0_138 = arith.constant 0 : index
    %280 = vector.load %arg10[%c34, %c0_138] : memref<64x128xf32, #tpu.memory_space<vmem>>, vector<1x128xf32>
    tpu.vector_store %arg10[%c34, %c0_138], %279 {strides = array<i32>} : memref<64x128xf32, #tpu.memory_space<vmem>>, vector<1x128xf32>,
    %c35_i32 = arith.constant 35 : i32
    %281 = arith.addi %0, %c35_i32 : i32
    %282 = arith.index_cast %281 : i32 to index
    %283 = memref.load %arg1[%282] : memref<128xi32, #tpu.memory_space<smem>>
    %c0_i32_139 = arith.constant 0 : i32
    %c511_i32_140 = arith.constant 511 : i32
    %284 = arith.maxsi %c0_i32_139, %283 : i32
    %285 = arith.minsi %c511_i32_140, %284 : i32
    %286 = arith.index_cast %285 : i32 to index
    %c0_141 = arith.constant 0 : index
    %287 = vector.load %arg2[%286, %c0_141] : memref<512x128xf32, #tpu.memory_space<vmem>>, vector<1x128xf32>
    %c35 = arith.constant 35 : index
    %c0_142 = arith.constant 0 : index
    %288 = vector.load %arg10[%c35, %c0_142] : memref<64x128xf32, #tpu.memory_space<vmem>>, vector<1x128xf32>
    tpu.vector_store %arg10[%c35, %c0_142], %287 {strides = array<i32>} : memref<64x128xf32, #tpu.memory_space<vmem>>, vector<1x128xf32>,
    %c36_i32 = arith.constant 36 : i32
    %289 = arith.addi %0, %c36_i32 : i32
    %290 = arith.index_cast %289 : i32 to index
    %291 = memref.load %arg1[%290] : memref<128xi32, #tpu.memory_space<smem>>
    %c0_i32_143 = arith.constant 0 : i32
    %c511_i32_144 = arith.constant 511 : i32
    %292 = arith.maxsi %c0_i32_143, %291 : i32
    %293 = arith.minsi %c511_i32_144, %292 : i32
    %294 = arith.index_cast %293 : i32 to index
    %c0_145 = arith.constant 0 : index
    %295 = vector.load %arg2[%294, %c0_145] : memref<512x128xf32, #tpu.memory_space<vmem>>, vector<1x128xf32>
    %c36 = arith.constant 36 : index
    %c0_146 = arith.constant 0 : index
    %296 = vector.load %arg10[%c36, %c0_146] : memref<64x128xf32, #tpu.memory_space<vmem>>, vector<1x128xf32>
    tpu.vector_store %arg10[%c36, %c0_146], %295 {strides = array<i32>} : memref<64x128xf32, #tpu.memory_space<vmem>>, vector<1x128xf32>,
    %c37_i32 = arith.constant 37 : i32
    %297 = arith.addi %0, %c37_i32 : i32
    %298 = arith.index_cast %297 : i32 to index
    %299 = memref.load %arg1[%298] : memref<128xi32, #tpu.memory_space<smem>>
    %c0_i32_147 = arith.constant 0 : i32
    %c511_i32_148 = arith.constant 511 : i32
    %300 = arith.maxsi %c0_i32_147, %299 : i32
    %301 = arith.minsi %c511_i32_148, %300 : i32
    %302 = arith.index_cast %301 : i32 to index
    %c0_149 = arith.constant 0 : index
    %303 = vector.load %arg2[%302, %c0_149] : memref<512x128xf32, #tpu.memory_space<vmem>>, vector<1x128xf32>
    %c37 = arith.constant 37 : index
    %c0_150 = arith.constant 0 : index
    %304 = vector.load %arg10[%c37, %c0_150] : memref<64x128xf32, #tpu.memory_space<vmem>>, vector<1x128xf32>
    tpu.vector_store %arg10[%c37, %c0_150], %303 {strides = array<i32>} : memref<64x128xf32, #tpu.memory_space<vmem>>, vector<1x128xf32>,
    %c38_i32 = arith.constant 38 : i32
    %305 = arith.addi %0, %c38_i32 : i32
    %306 = arith.index_cast %305 : i32 to index
    %307 = memref.load %arg1[%306] : memref<128xi32, #tpu.memory_space<smem>>
    %c0_i32_151 = arith.constant 0 : i32
    %c511_i32_152 = arith.constant 511 : i32
    %308 = arith.maxsi %c0_i32_151, %307 : i32
    %309 = arith.minsi %c511_i32_152, %308 : i32
    %310 = arith.index_cast %309 : i32 to index
    %c0_153 = arith.constant 0 : index
    %311 = vector.load %arg2[%310, %c0_153] : memref<512x128xf32, #tpu.memory_space<vmem>>, vector<1x128xf32>
    %c38 = arith.constant 38 : index
    %c0_154 = arith.constant 0 : index
    %312 = vector.load %arg10[%c38, %c0_154] : memref<64x128xf32, #tpu.memory_space<vmem>>, vector<1x128xf32>
    tpu.vector_store %arg10[%c38, %c0_154], %311 {strides = array<i32>} : memref<64x128xf32, #tpu.memory_space<vmem>>, vector<1x128xf32>,
    %c39_i32 = arith.constant 39 : i32
    %313 = arith.addi %0, %c39_i32 : i32
    %314 = arith.index_cast %313 : i32 to index
    %315 = memref.load %arg1[%314] : memref<128xi32, #tpu.memory_space<smem>>
    %c0_i32_155 = arith.constant 0 : i32
    %c511_i32_156 = arith.constant 511 : i32
    %316 = arith.maxsi %c0_i32_155, %315 : i32
    %317 = arith.minsi %c511_i32_156, %316 : i32
    %318 = arith.index_cast %317 : i32 to index
    %c0_157 = arith.constant 0 : index
    %319 = vector.load %arg2[%318, %c0_157] : memref<512x128xf32, #tpu.memory_space<vmem>>, vector<1x128xf32>
    %c39 = arith.constant 39 : index
    %c0_158 = arith.constant 0 : index
    %320 = vector.load %arg10[%c39, %c0_158] : memref<64x128xf32, #tpu.memory_space<vmem>>, vector<1x128xf32>
    tpu.vector_store %arg10[%c39, %c0_158], %319 {strides = array<i32>} : memref<64x128xf32, #tpu.memory_space<vmem>>, vector<1x128xf32>,
    %c40_i32 = arith.constant 40 : i32
    %321 = arith.addi %0, %c40_i32 : i32
    %322 = arith.index_cast %321 : i32 to index
    %323 = memref.load %arg1[%322] : memref<128xi32, #tpu.memory_space<smem>>
    %c0_i32_159 = arith.constant 0 : i32
    %c511_i32_160 = arith.constant 511 : i32
    %324 = arith.maxsi %c0_i32_159, %323 : i32
    %325 = arith.minsi %c511_i32_160, %324 : i32
    %326 = arith.index_cast %325 : i32 to index
    %c0_161 = arith.constant 0 : index
    %327 = vector.load %arg2[%326, %c0_161] : memref<512x128xf32, #tpu.memory_space<vmem>>, vector<1x128xf32>
    %c40 = arith.constant 40 : index
    %c0_162 = arith.constant 0 : index
    %328 = vector.load %arg10[%c40, %c0_162] : memref<64x128xf32, #tpu.memory_space<vmem>>, vector<1x128xf32>
    tpu.vector_store %arg10[%c40, %c0_162], %327 {strides = array<i32>} : memref<64x128xf32, #tpu.memory_space<vmem>>, vector<1x128xf32>,
    %c41_i32 = arith.constant 41 : i32
    %329 = arith.addi %0, %c41_i32 : i32
    %330 = arith.index_cast %329 : i32 to index
    %331 = memref.load %arg1[%330] : memref<128xi32, #tpu.memory_space<smem>>
    %c0_i32_163 = arith.constant 0 : i32
    %c511_i32_164 = arith.constant 511 : i32
    %332 = arith.maxsi %c0_i32_163, %331 : i32
    %333 = arith.minsi %c511_i32_164, %332 : i32
    %334 = arith.index_cast %333 : i32 to index
    %c0_165 = arith.constant 0 : index
    %335 = vector.load %arg2[%334, %c0_165] : memref<512x128xf32, #tpu.memory_space<vmem>>, vector<1x128xf32>
    %c41 = arith.constant 41 : index
    %c0_166 = arith.constant 0 : index
    %336 = vector.load %arg10[%c41, %c0_166] : memref<64x128xf32, #tpu.memory_space<vmem>>, vector<1x128xf32>
    tpu.vector_store %arg10[%c41, %c0_166], %335 {strides = array<i32>} : memref<64x128xf32, #tpu.memory_space<vmem>>, vector<1x128xf32>,
    %c42_i32 = arith.constant 42 : i32
    %337 = arith.addi %0, %c42_i32 : i32
    %338 = arith.index_cast %337 : i32 to index
    %339 = memref.load %arg1[%338] : memref<128xi32, #tpu.memory_space<smem>>
    %c0_i32_167 = arith.constant 0 : i32
    %c511_i32_168 = arith.constant 511 : i32
    %340 = arith.maxsi %c0_i32_167, %339 : i32
    %341 = arith.minsi %c511_i32_168, %340 : i32
    %342 = arith.index_cast %341 : i32 to index
    %c0_169 = arith.constant 0 : index
    %343 = vector.load %arg2[%342, %c0_169] : memref<512x128xf32, #tpu.memory_space<vmem>>, vector<1x128xf32>
    %c42 = arith.constant 42 : index
    %c0_170 = arith.constant 0 : index
    %344 = vector.load %arg10[%c42, %c0_170] : memref<64x128xf32, #tpu.memory_space<vmem>>, vector<1x128xf32>
    tpu.vector_store %arg10[%c42, %c0_170], %343 {strides = array<i32>} : memref<64x128xf32, #tpu.memory_space<vmem>>, vector<1x128xf32>,
    %c43_i32 = arith.constant 43 : i32
    %345 = arith.addi %0, %c43_i32 : i32
    %346 = arith.index_cast %345 : i32 to index
    %347 = memref.load %arg1[%346] : memref<128xi32, #tpu.memory_space<smem>>
    %c0_i32_171 = arith.constant 0 : i32
    %c511_i32_172 = arith.constant 511 : i32
    %348 = arith.maxsi %c0_i32_171, %347 : i32
    %349 = arith.minsi %c511_i32_172, %348 : i32
    %350 = arith.index_cast %349 : i32 to index
    %c0_173 = arith.constant 0 : index
    %351 = vector.load %arg2[%350, %c0_173] : memref<512x128xf32, #tpu.memory_space<vmem>>, vector<1x128xf32>
    %c43 = arith.constant 43 : index
    %c0_174 = arith.constant 0 : index
    %352 = vector.load %arg10[%c43, %c0_174] : memref<64x128xf32, #tpu.memory_space<vmem>>, vector<1x128xf32>
    tpu.vector_store %arg10[%c43, %c0_174], %351 {strides = array<i32>} : memref<64x128xf32, #tpu.memory_space<vmem>>, vector<1x128xf32>,
    %c44_i32 = arith.constant 44 : i32
    %353 = arith.addi %0, %c44_i32 : i32
    %354 = arith.index_cast %353 : i32 to index
    %355 = memref.load %arg1[%354] : memref<128xi32, #tpu.memory_space<smem>>
    %c0_i32_175 = arith.constant 0 : i32
    %c511_i32_176 = arith.constant 511 : i32
    %356 = arith.maxsi %c0_i32_175, %355 : i32
    %357 = arith.minsi %c511_i32_176, %356 : i32
    %358 = arith.index_cast %357 : i32 to index
    %c0_177 = arith.constant 0 : index
    %359 = vector.load %arg2[%358, %c0_177] : memref<512x128xf32, #tpu.memory_space<vmem>>, vector<1x128xf32>
    %c44 = arith.constant 44 : index
    %c0_178 = arith.constant 0 : index
    %360 = vector.load %arg10[%c44, %c0_178] : memref<64x128xf32, #tpu.memory_space<vmem>>, vector<1x128xf32>
    tpu.vector_store %arg10[%c44, %c0_178], %359 {strides = array<i32>} : memref<64x128xf32, #tpu.memory_space<vmem>>, vector<1x128xf32>,
    %c45_i32 = arith.constant 45 : i32
    %361 = arith.addi %0, %c45_i32 : i32
    %362 = arith.index_cast %361 : i32 to index
    %363 = memref.load %arg1[%362] : memref<128xi32, #tpu.memory_space<smem>>
    %c0_i32_179 = arith.constant 0 : i32
    %c511_i32_180 = arith.constant 511 : i32
    %364 = arith.maxsi %c0_i32_179, %363 : i32
    %365 = arith.minsi %c511_i32_180, %364 : i32
    %366 = arith.index_cast %365 : i32 to index
    %c0_181 = arith.constant 0 : index
    %367 = vector.load %arg2[%366, %c0_181] : memref<512x128xf32, #tpu.memory_space<vmem>>, vector<1x128xf32>
    %c45 = arith.constant 45 : index
    %c0_182 = arith.constant 0 : index
    %368 = vector.load %arg10[%c45, %c0_182] : memref<64x128xf32, #tpu.memory_space<vmem>>, vector<1x128xf32>
    tpu.vector_store %arg10[%c45, %c0_182], %367 {strides = array<i32>} : memref<64x128xf32, #tpu.memory_space<vmem>>, vector<1x128xf32>,
    %c46_i32 = arith.constant 46 : i32
    %369 = arith.addi %0, %c46_i32 : i32
    %370 = arith.index_cast %369 : i32 to index
    %371 = memref.load %arg1[%370] : memref<128xi32, #tpu.memory_space<smem>>
    %c0_i32_183 = arith.constant 0 : i32
    %c511_i32_184 = arith.constant 511 : i32
    %372 = arith.maxsi %c0_i32_183, %371 : i32
    %373 = arith.minsi %c511_i32_184, %372 : i32
    %374 = arith.index_cast %373 : i32 to index
    %c0_185 = arith.constant 0 : index
    %375 = vector.load %arg2[%374, %c0_185] : memref<512x128xf32, #tpu.memory_space<vmem>>, vector<1x128xf32>
    %c46 = arith.constant 46 : index
    %c0_186 = arith.constant 0 : index
    %376 = vector.load %arg10[%c46, %c0_186] : memref<64x128xf32, #tpu.memory_space<vmem>>, vector<1x128xf32>
    tpu.vector_store %arg10[%c46, %c0_186], %375 {strides = array<i32>} : memref<64x128xf32, #tpu.memory_space<vmem>>, vector<1x128xf32>,
    %c47_i32 = arith.constant 47 : i32
    %377 = arith.addi %0, %c47_i32 : i32
    %378 = arith.index_cast %377 : i32 to index
    %379 = memref.load %arg1[%378] : memref<128xi32, #tpu.memory_space<smem>>
    %c0_i32_187 = arith.constant 0 : i32
    %c511_i32_188 = arith.constant 511 : i32
    %380 = arith.maxsi %c0_i32_187, %379 : i32
    %381 = arith.minsi %c511_i32_188, %380 : i32
    %382 = arith.index_cast %381 : i32 to index
    %c0_189 = arith.constant 0 : index
    %383 = vector.load %arg2[%382, %c0_189] : memref<512x128xf32, #tpu.memory_space<vmem>>, vector<1x128xf32>
    %c47 = arith.constant 47 : index
    %c0_190 = arith.constant 0 : index
    %384 = vector.load %arg10[%c47, %c0_190] : memref<64x128xf32, #tpu.memory_space<vmem>>, vector<1x128xf32>
    tpu.vector_store %arg10[%c47, %c0_190], %383 {strides = array<i32>} : memref<64x128xf32, #tpu.memory_space<vmem>>, vector<1x128xf32>,
    %c48_i32 = arith.constant 48 : i32
    %385 = arith.addi %0, %c48_i32 : i32
    %386 = arith.index_cast %385 : i32 to index
    %387 = memref.load %arg1[%386] : memref<128xi32, #tpu.memory_space<smem>>
    %c0_i32_191 = arith.constant 0 : i32
    %c511_i32_192 = arith.constant 511 : i32
    %388 = arith.maxsi %c0_i32_191, %387 : i32
    %389 = arith.minsi %c511_i32_192, %388 : i32
    %390 = arith.index_cast %389 : i32 to index
    %c0_193 = arith.constant 0 : index
    %391 = vector.load %arg2[%390, %c0_193] : memref<512x128xf32, #tpu.memory_space<vmem>>, vector<1x128xf32>
    %c48 = arith.constant 48 : index
    %c0_194 = arith.constant 0 : index
    %392 = vector.load %arg10[%c48, %c0_194] : memref<64x128xf32, #tpu.memory_space<vmem>>, vector<1x128xf32>
    tpu.vector_store %arg10[%c48, %c0_194], %391 {strides = array<i32>} : memref<64x128xf32, #tpu.memory_space<vmem>>, vector<1x128xf32>,
    %c49_i32 = arith.constant 49 : i32
    %393 = arith.addi %0, %c49_i32 : i32
    %394 = arith.index_cast %393 : i32 to index
    %395 = memref.load %arg1[%394] : memref<128xi32, #tpu.memory_space<smem>>
    %c0_i32_195 = arith.constant 0 : i32
    %c511_i32_196 = arith.constant 511 : i32
    %396 = arith.maxsi %c0_i32_195, %395 : i32
    %397 = arith.minsi %c511_i32_196, %396 : i32
    %398 = arith.index_cast %397 : i32 to index
    %c0_197 = arith.constant 0 : index
    %399 = vector.load %arg2[%398, %c0_197] : memref<512x128xf32, #tpu.memory_space<vmem>>, vector<1x128xf32>
    %c49 = arith.constant 49 : index
    %c0_198 = arith.constant 0 : index
    %400 = vector.load %arg10[%c49, %c0_198] : memref<64x128xf32, #tpu.memory_space<vmem>>, vector<1x128xf32>
    tpu.vector_store %arg10[%c49, %c0_198], %399 {strides = array<i32>} : memref<64x128xf32, #tpu.memory_space<vmem>>, vector<1x128xf32>,
    %c50_i32 = arith.constant 50 : i32
    %401 = arith.addi %0, %c50_i32 : i32
    %402 = arith.index_cast %401 : i32 to index
    %403 = memref.load %arg1[%402] : memref<128xi32, #tpu.memory_space<smem>>
    %c0_i32_199 = arith.constant 0 : i32
    %c511_i32_200 = arith.constant 511 : i32
    %404 = arith.maxsi %c0_i32_199, %403 : i32
    %405 = arith.minsi %c511_i32_200, %404 : i32
    %406 = arith.index_cast %405 : i32 to index
    %c0_201 = arith.constant 0 : index
    %407 = vector.load %arg2[%406, %c0_201] : memref<512x128xf32, #tpu.memory_space<vmem>>, vector<1x128xf32>
    %c50 = arith.constant 50 : index
    %c0_202 = arith.constant 0 : index
    %408 = vector.load %arg10[%c50, %c0_202] : memref<64x128xf32, #tpu.memory_space<vmem>>, vector<1x128xf32>
    tpu.vector_store %arg10[%c50, %c0_202], %407 {strides = array<i32>} : memref<64x128xf32, #tpu.memory_space<vmem>>, vector<1x128xf32>,
    %c51_i32 = arith.constant 51 : i32
    %409 = arith.addi %0, %c51_i32 : i32
    %410 = arith.index_cast %409 : i32 to index
    %411 = memref.load %arg1[%410] : memref<128xi32, #tpu.memory_space<smem>>
    %c0_i32_203 = arith.constant 0 : i32
    %c511_i32_204 = arith.constant 511 : i32
    %412 = arith.maxsi %c0_i32_203, %411 : i32
    %413 = arith.minsi %c511_i32_204, %412 : i32
    %414 = arith.index_cast %413 : i32 to index
    %c0_205 = arith.constant 0 : index
    %415 = vector.load %arg2[%414, %c0_205] : memref<512x128xf32, #tpu.memory_space<vmem>>, vector<1x128xf32>
    %c51 = arith.constant 51 : index
    %c0_206 = arith.constant 0 : index
    %416 = vector.load %arg10[%c51, %c0_206] : memref<64x128xf32, #tpu.memory_space<vmem>>, vector<1x128xf32>
    tpu.vector_store %arg10[%c51, %c0_206], %415 {strides = array<i32>} : memref<64x128xf32, #tpu.memory_space<vmem>>, vector<1x128xf32>,
    %c52_i32 = arith.constant 52 : i32
    %417 = arith.addi %0, %c52_i32 : i32
    %418 = arith.index_cast %417 : i32 to index
    %419 = memref.load %arg1[%418] : memref<128xi32, #tpu.memory_space<smem>>
    %c0_i32_207 = arith.constant 0 : i32
    %c511_i32_208 = arith.constant 511 : i32
    %420 = arith.maxsi %c0_i32_207, %419 : i32
    %421 = arith.minsi %c511_i32_208, %420 : i32
    %422 = arith.index_cast %421 : i32 to index
    %c0_209 = arith.constant 0 : index
    %423 = vector.load %arg2[%422, %c0_209] : memref<512x128xf32, #tpu.memory_space<vmem>>, vector<1x128xf32>
    %c52 = arith.constant 52 : index
    %c0_210 = arith.constant 0 : index
    %424 = vector.load %arg10[%c52, %c0_210] : memref<64x128xf32, #tpu.memory_space<vmem>>, vector<1x128xf32>
    tpu.vector_store %arg10[%c52, %c0_210], %423 {strides = array<i32>} : memref<64x128xf32, #tpu.memory_space<vmem>>, vector<1x128xf32>,
    %c53_i32 = arith.constant 53 : i32
    %425 = arith.addi %0, %c53_i32 : i32
    %426 = arith.index_cast %425 : i32 to index
    %427 = memref.load %arg1[%426] : memref<128xi32, #tpu.memory_space<smem>>
    %c0_i32_211 = arith.constant 0 : i32
    %c511_i32_212 = arith.constant 511 : i32
    %428 = arith.maxsi %c0_i32_211, %427 : i32
    %429 = arith.minsi %c511_i32_212, %428 : i32
    %430 = arith.index_cast %429 : i32 to index
    %c0_213 = arith.constant 0 : index
    %431 = vector.load %arg2[%430, %c0_213] : memref<512x128xf32, #tpu.memory_space<vmem>>, vector<1x128xf32>
    %c53 = arith.constant 53 : index
    %c0_214 = arith.constant 0 : index
    %432 = vector.load %arg10[%c53, %c0_214] : memref<64x128xf32, #tpu.memory_space<vmem>>, vector<1x128xf32>
    tpu.vector_store %arg10[%c53, %c0_214], %431 {strides = array<i32>} : memref<64x128xf32, #tpu.memory_space<vmem>>, vector<1x128xf32>,
    %c54_i32 = arith.constant 54 : i32
    %433 = arith.addi %0, %c54_i32 : i32
    %434 = arith.index_cast %433 : i32 to index
    %435 = memref.load %arg1[%434] : memref<128xi32, #tpu.memory_space<smem>>
    %c0_i32_215 = arith.constant 0 : i32
    %c511_i32_216 = arith.constant 511 : i32
    %436 = arith.maxsi %c0_i32_215, %435 : i32
    %437 = arith.minsi %c511_i32_216, %436 : i32
    %438 = arith.index_cast %437 : i32 to index
    %c0_217 = arith.constant 0 : index
    %439 = vector.load %arg2[%438, %c0_217] : memref<512x128xf32, #tpu.memory_space<vmem>>, vector<1x128xf32>
    %c54 = arith.constant 54 : index
    %c0_218 = arith.constant 0 : index
    %440 = vector.load %arg10[%c54, %c0_218] : memref<64x128xf32, #tpu.memory_space<vmem>>, vector<1x128xf32>
    tpu.vector_store %arg10[%c54, %c0_218], %439 {strides = array<i32>} : memref<64x128xf32, #tpu.memory_space<vmem>>, vector<1x128xf32>,
    %c55_i32 = arith.constant 55 : i32
    %441 = arith.addi %0, %c55_i32 : i32
    %442 = arith.index_cast %441 : i32 to index
    %443 = memref.load %arg1[%442] : memref<128xi32, #tpu.memory_space<smem>>
    %c0_i32_219 = arith.constant 0 : i32
    %c511_i32_220 = arith.constant 511 : i32
    %444 = arith.maxsi %c0_i32_219, %443 : i32
    %445 = arith.minsi %c511_i32_220, %444 : i32
    %446 = arith.index_cast %445 : i32 to index
    %c0_221 = arith.constant 0 : index
    %447 = vector.load %arg2[%446, %c0_221] : memref<512x128xf32, #tpu.memory_space<vmem>>, vector<1x128xf32>
    %c55 = arith.constant 55 : index
    %c0_222 = arith.constant 0 : index
    %448 = vector.load %arg10[%c55, %c0_222] : memref<64x128xf32, #tpu.memory_space<vmem>>, vector<1x128xf32>
    tpu.vector_store %arg10[%c55, %c0_222], %447 {strides = array<i32>} : memref<64x128xf32, #tpu.memory_space<vmem>>, vector<1x128xf32>,
    %c56_i32 = arith.constant 56 : i32
    %449 = arith.addi %0, %c56_i32 : i32
    %450 = arith.index_cast %449 : i32 to index
    %451 = memref.load %arg1[%450] : memref<128xi32, #tpu.memory_space<smem>>
    %c0_i32_223 = arith.constant 0 : i32
    %c511_i32_224 = arith.constant 511 : i32
    %452 = arith.maxsi %c0_i32_223, %451 : i32
    %453 = arith.minsi %c511_i32_224, %452 : i32
    %454 = arith.index_cast %453 : i32 to index
    %c0_225 = arith.constant 0 : index
    %455 = vector.load %arg2[%454, %c0_225] : memref<512x128xf32, #tpu.memory_space<vmem>>, vector<1x128xf32>
    %c56 = arith.constant 56 : index
    %c0_226 = arith.constant 0 : index
    %456 = vector.load %arg10[%c56, %c0_226] : memref<64x128xf32, #tpu.memory_space<vmem>>, vector<1x128xf32>
    tpu.vector_store %arg10[%c56, %c0_226], %455 {strides = array<i32>} : memref<64x128xf32, #tpu.memory_space<vmem>>, vector<1x128xf32>,
    %c57_i32 = arith.constant 57 : i32
    %457 = arith.addi %0, %c57_i32 : i32
    %458 = arith.index_cast %457 : i32 to index
    %459 = memref.load %arg1[%458] : memref<128xi32, #tpu.memory_space<smem>>
    %c0_i32_227 = arith.constant 0 : i32
    %c511_i32_228 = arith.constant 511 : i32
    %460 = arith.maxsi %c0_i32_227, %459 : i32
    %461 = arith.minsi %c511_i32_228, %460 : i32
    %462 = arith.index_cast %461 : i32 to index
    %c0_229 = arith.constant 0 : index
    %463 = vector.load %arg2[%462, %c0_229] : memref<512x128xf32, #tpu.memory_space<vmem>>, vector<1x128xf32>
    %c57 = arith.constant 57 : index
    %c0_230 = arith.constant 0 : index
    %464 = vector.load %arg10[%c57, %c0_230] : memref<64x128xf32, #tpu.memory_space<vmem>>, vector<1x128xf32>
    tpu.vector_store %arg10[%c57, %c0_230], %463 {strides = array<i32>} : memref<64x128xf32, #tpu.memory_space<vmem>>, vector<1x128xf32>,
    %c58_i32 = arith.constant 58 : i32
    %465 = arith.addi %0, %c58_i32 : i32
    %466 = arith.index_cast %465 : i32 to index
    %467 = memref.load %arg1[%466] : memref<128xi32, #tpu.memory_space<smem>>
    %c0_i32_231 = arith.constant 0 : i32
    %c511_i32_232 = arith.constant 511 : i32
    %468 = arith.maxsi %c0_i32_231, %467 : i32
    %469 = arith.minsi %c511_i32_232, %468 : i32
    %470 = arith.index_cast %469 : i32 to index
    %c0_233 = arith.constant 0 : index
    %471 = vector.load %arg2[%470, %c0_233] : memref<512x128xf32, #tpu.memory_space<vmem>>, vector<1x128xf32>
    %c58 = arith.constant 58 : index
    %c0_234 = arith.constant 0 : index
    %472 = vector.load %arg10[%c58, %c0_234] : memref<64x128xf32, #tpu.memory_space<vmem>>, vector<1x128xf32>
    tpu.vector_store %arg10[%c58, %c0_234], %471 {strides = array<i32>} : memref<64x128xf32, #tpu.memory_space<vmem>>, vector<1x128xf32>,
    %c59_i32 = arith.constant 59 : i32
    %473 = arith.addi %0, %c59_i32 : i32
    %474 = arith.index_cast %473 : i32 to index
    %475 = memref.load %arg1[%474] : memref<128xi32, #tpu.memory_space<smem>>
    %c0_i32_235 = arith.constant 0 : i32
    %c511_i32_236 = arith.constant 511 : i32
    %476 = arith.maxsi %c0_i32_235, %475 : i32
    %477 = arith.minsi %c511_i32_236, %476 : i32
    %478 = arith.index_cast %477 : i32 to index
    %c0_237 = arith.constant 0 : index
    %479 = vector.load %arg2[%478, %c0_237] : memref<512x128xf32, #tpu.memory_space<vmem>>, vector<1x128xf32>
    %c59 = arith.constant 59 : index
    %c0_238 = arith.constant 0 : index
    %480 = vector.load %arg10[%c59, %c0_238] : memref<64x128xf32, #tpu.memory_space<vmem>>, vector<1x128xf32>
    tpu.vector_store %arg10[%c59, %c0_238], %479 {strides = array<i32>} : memref<64x128xf32, #tpu.memory_space<vmem>>, vector<1x128xf32>,
    %c60_i32 = arith.constant 60 : i32
    %481 = arith.addi %0, %c60_i32 : i32
    %482 = arith.index_cast %481 : i32 to index
    %483 = memref.load %arg1[%482] : memref<128xi32, #tpu.memory_space<smem>>
    %c0_i32_239 = arith.constant 0 : i32
    %c511_i32_240 = arith.constant 511 : i32
    %484 = arith.maxsi %c0_i32_239, %483 : i32
    %485 = arith.minsi %c511_i32_240, %484 : i32
    %486 = arith.index_cast %485 : i32 to index
    %c0_241 = arith.constant 0 : index
    %487 = vector.load %arg2[%486, %c0_241] : memref<512x128xf32, #tpu.memory_space<vmem>>, vector<1x128xf32>
    %c60 = arith.constant 60 : index
    %c0_242 = arith.constant 0 : index
    %488 = vector.load %arg10[%c60, %c0_242] : memref<64x128xf32, #tpu.memory_space<vmem>>, vector<1x128xf32>
    tpu.vector_store %arg10[%c60, %c0_242], %487 {strides = array<i32>} : memref<64x128xf32, #tpu.memory_space<vmem>>, vector<1x128xf32>,
    %c61_i32 = arith.constant 61 : i32
    %489 = arith.addi %0, %c61_i32 : i32
    %490 = arith.index_cast %489 : i32 to index
    %491 = memref.load %arg1[%490] : memref<128xi32, #tpu.memory_space<smem>>
    %c0_i32_243 = arith.constant 0 : i32
    %c511_i32_244 = arith.constant 511 : i32
    %492 = arith.maxsi %c0_i32_243, %491 : i32
    %493 = arith.minsi %c511_i32_244, %492 : i32
    %494 = arith.index_cast %493 : i32 to index
    %c0_245 = arith.constant 0 : index
    %495 = vector.load %arg2[%494, %c0_245] : memref<512x128xf32, #tpu.memory_space<vmem>>, vector<1x128xf32>
    %c61 = arith.constant 61 : index
    %c0_246 = arith.constant 0 : index
    %496 = vector.load %arg10[%c61, %c0_246] : memref<64x128xf32, #tpu.memory_space<vmem>>, vector<1x128xf32>
    tpu.vector_store %arg10[%c61, %c0_246], %495 {strides = array<i32>} : memref<64x128xf32, #tpu.memory_space<vmem>>, vector<1x128xf32>,
    %c62_i32 = arith.constant 62 : i32
    %497 = arith.addi %0, %c62_i32 : i32
    %498 = arith.index_cast %497 : i32 to index
    %499 = memref.load %arg1[%498] : memref<128xi32, #tpu.memory_space<smem>>
    %c0_i32_247 = arith.constant 0 : i32
    %c511_i32_248 = arith.constant 511 : i32
    %500 = arith.maxsi %c0_i32_247, %499 : i32
    %501 = arith.minsi %c511_i32_248, %500 : i32
    %502 = arith.index_cast %501 : i32 to index
    %c0_249 = arith.constant 0 : index
    %503 = vector.load %arg2[%502, %c0_249] : memref<512x128xf32, #tpu.memory_space<vmem>>, vector<1x128xf32>
    %c62 = arith.constant 62 : index
    %c0_250 = arith.constant 0 : index
    %504 = vector.load %arg10[%c62, %c0_250] : memref<64x128xf32, #tpu.memory_space<vmem>>, vector<1x128xf32>
    tpu.vector_store %arg10[%c62, %c0_250], %503 {strides = array<i32>} : memref<64x128xf32, #tpu.memory_space<vmem>>, vector<1x128xf32>,
    %c63_i32 = arith.constant 63 : i32
    %505 = arith.addi %0, %c63_i32 : i32
    %506 = arith.index_cast %505 : i32 to index
    %507 = memref.load %arg1[%506] : memref<128xi32, #tpu.memory_space<smem>>
    %c0_i32_251 = arith.constant 0 : i32
    %c511_i32_252 = arith.constant 511 : i32
    %508 = arith.maxsi %c0_i32_251, %507 : i32
    %509 = arith.minsi %c511_i32_252, %508 : i32
    %510 = arith.index_cast %509 : i32 to index
    %c0_253 = arith.constant 0 : index
    %511 = vector.load %arg2[%510, %c0_253] : memref<512x128xf32, #tpu.memory_space<vmem>>, vector<1x128xf32>
    %c63 = arith.constant 63 : index
    %c0_254 = arith.constant 0 : index
    %512 = vector.load %arg10[%c63, %c0_254] : memref<64x128xf32, #tpu.memory_space<vmem>>, vector<1x128xf32>
    tpu.vector_store %arg10[%c63, %c0_254], %511 {strides = array<i32>} : memref<64x128xf32, #tpu.memory_space<vmem>>, vector<1x128xf32>,
    %c0_255 = arith.constant 0 : index
    %c0_256 = arith.constant 0 : index
    %513 = vector.load %arg10[%c0_255, %c0_256] : memref<64x128xf32, #tpu.memory_space<vmem>>, vector<64x128xf32>
    %c0_257 = arith.constant 0 : index
    %c0_258 = arith.constant 0 : index
    %514 = vector.load %arg6[%c0_257, %c0_258] : memref<1x128xf32, #tpu.memory_space<vmem>>, vector<1x128xf32>
    %c0_259 = arith.constant 0 : index
    %c0_260 = arith.constant 0 : index
    %515 = vector.load %arg7[%c0_259, %c0_260] : memref<1x128xf32, #tpu.memory_space<vmem>>, vector<1x128xf32>
    %cst = arith.constant dense<0.000000e+00> : vector<64xf32>
    %516 = vector.multi_reduction <add>, %513, %cst [1] : vector<64x128xf32> to vector<64xf32>
    %517 = vector.shape_cast %516 : vector<64xf32> to vector<64x1xf32>
    %cst_261 = arith.constant 1.280000e+02 : f32
    %518 = vector.broadcast %cst_261 : f32 to vector<64x1xf32>
    %519 = arith.divf %517, %518 : vector<64x1xf32>
    %520 = vector.broadcast %519 : vector<64x1xf32> to vector<64x128xf32>
    %521 = arith.subf %513, %520 : vector<64x128xf32>
    %522 = arith.mulf %521, %521 : vector<64x128xf32>
    %cst_262 = arith.constant dense<0.000000e+00> : vector<64xf32>
    %523 = vector.multi_reduction <add>, %522, %cst_262 [1] : vector<64x128xf32> to vector<64xf32>
    %524 = vector.shape_cast %523 : vector<64xf32> to vector<64x1xf32>
    %cst_263 = arith.constant 1.280000e+02 : f32
    %525 = vector.broadcast %cst_263 : f32 to vector<64x1xf32>
    %526 = arith.divf %524, %525 : vector<64x1xf32>
    %527 = vector.broadcast %519 : vector<64x1xf32> to vector<64x128xf32>
    %528 = arith.subf %513, %527 : vector<64x128xf32>
    %cst_264 = arith.constant 9.99999974E-6 : f32
    %529 = vector.broadcast %cst_264 : f32 to vector<64x1xf32>
    %530 = arith.addf %526, %529 : vector<64x1xf32>
    %531 = math.rsqrt %530 : vector<64x1xf32>
    %532 = vector.broadcast %531 : vector<64x1xf32> to vector<64x128xf32>
    %533 = arith.mulf %528, %532 : vector<64x128xf32>
    %534 = vector.broadcast %514 : vector<1x128xf32> to vector<64x128xf32>
    %535 = arith.mulf %533, %534 : vector<64x128xf32>
    %536 = vector.broadcast %515 : vector<1x128xf32> to vector<64x128xf32>
    %537 = arith.addf %535, %536 : vector<64x128xf32>
    %538 = arith.truncf %537 : vector<64x128xf32> to vector<64x128xbf16>
    %c0_265 = arith.constant 0 : index
    %c0_266 = arith.constant 0 : index
    %539 = vector.load %arg8[%c0_265, %c0_266] : memref<128x128xbf16, #tpu.memory_space<vmem>>, vector<128x128xbf16>
    %cst_267 = arith.constant dense<0.000000e+00> : vector<64x128xf32>
    %540 = tpu.matmul %538, %539, %cst_267 {dimension_numbers = #tpu.dot_dimension_numbers<[1], [0], [0], [1], [0, 0, 1, 1], [], []>} : vector<64x128xbf16>, vector<128x128xbf16>, vector<64x128xf32> -> vector<64x128xf32>
    %541 = vector.shape_cast %540 : vector<64x128xf32> to vector<8x8x128xf32>
    %c0_268 = arith.constant 0 : index
    %c0_269 = arith.constant 0 : index
    %542 = vector.load %arg3[%c0_268, %c0_269] : memref<8x4xf32, #tpu.memory_space<vmem>>, vector<8x4xf32>
    %543 = vector.shape_cast %542 : vector<8x4xf32> to vector<8x4x1xf32>
    %c0_270 = arith.constant 0 : index
    %c0_271 = arith.constant 0 : index
    %544 = vector.load %arg4[%c0_270, %c0_271] : memref<4x128xf32, #tpu.memory_space<vmem>>, vector<4x128xf32>
    %545 = vector.shape_cast %544 : vector<4x128xf32> to vector<1x4x128xf32>
    %546 = vector.broadcast %543 : vector<8x4x1xf32> to vector<8x4x128xf32>
    %547 = vector.broadcast %545 : vector<1x4x128xf32> to vector<8x4x128xf32>
    %548 = arith.mulf %546, %547 : vector<8x4x128xf32>
    %c0_272 = arith.constant 0 : index
    %c0_273 = arith.constant 0 : index
    %549 = vector.load %arg5[%c0_272, %c0_273] : memref<1x128xf32, #tpu.memory_space<vmem>>, vector<1x128xf32>
    %550 = vector.shape_cast %549 : vector<1x128xf32> to vector<1x1x128xf32>
    %551 = vector.broadcast %550 : vector<1x1x128xf32> to vector<8x4x128xf32>
    %552 = arith.addf %548, %551 : vector<8x4x128xf32>
    %553 = tpu.concatenate %552, %541 in 1 : vector<8x4x128xf32>, vector<8x8x128xf32> -> vector<8x12x128xf32>
    %c0_274 = arith.constant 0 : index
    %c0_275 = arith.constant 0 : index
    %c0_276 = arith.constant 0 : index
    %554 = vector.load %arg9[%c0_274, %c0_275, %c0_276] : memref<8x12x128xf32, #tpu.memory_space<vmem>>, vector<8x12x128xf32>
    tpu.vector_store %arg9[%c0_274, %c0_275, %c0_276], %553 {strides = array<i32>} : memref<8x12x128xf32, #tpu.memory_space<vmem>>, vector<8x12x128xf32>,
    return
  }
  func.func @transform_0(%arg0: i32, %arg1: memref<128xi32, #tpu.memory_space<smem>>) -> (i32, i32) {
    %c0_i32 = arith.constant 0 : i32
    %c0_i32_0 = arith.constant 0 : i32
    %c0_i32_1 = arith.constant 0 : i32
    return %c0_i32, %c0_i32_0 : i32, i32
  }
  func.func @transform_1(%arg0: i32, %arg1: memref<128xi32, #tpu.memory_space<smem>>) -> (i32, i32) {
    %c0_i32 = arith.constant 0 : i32
    %c0_i32_0 = arith.constant 0 : i32
    return %arg0, %c0_i32 : i32, i32
  }
  func.func @transform_2(%arg0: i32, %arg1: memref<128xi32, #tpu.memory_space<smem>>) -> (i32, i32) {
    %c0_i32 = arith.constant 0 : i32
    %c0_i32_0 = arith.constant 0 : i32
    %c0_i32_1 = arith.constant 0 : i32
    return %c0_i32, %c0_i32_0 : i32, i32
  }
  func.func @transform_3(%arg0: i32, %arg1: memref<128xi32, #tpu.memory_space<smem>>) -> (i32, i32) {
    %c0_i32 = arith.constant 0 : i32
    %c0_i32_0 = arith.constant 0 : i32
    %c0_i32_1 = arith.constant 0 : i32
    return %c0_i32, %c0_i32_0 : i32, i32
  }
  func.func @transform_4(%arg0: i32, %arg1: memref<128xi32, #tpu.memory_space<smem>>) -> (i32, i32) {
    %c0_i32 = arith.constant 0 : i32
    %c0_i32_0 = arith.constant 0 : i32
    %c0_i32_1 = arith.constant 0 : i32
    return %c0_i32, %c0_i32_0 : i32, i32
  }
  func.func @transform_5(%arg0: i32, %arg1: memref<128xi32, #tpu.memory_space<smem>>) -> (i32, i32) {
    %c0_i32 = arith.constant 0 : i32
    %c0_i32_0 = arith.constant 0 : i32
    %c0_i32_1 = arith.constant 0 : i32
    return %c0_i32, %c0_i32_0 : i32, i32
  }
  func.func @transform_6(%arg0: i32, %arg1: memref<128xi32, #tpu.memory_space<smem>>) -> (i32, i32) {
    %c0_i32 = arith.constant 0 : i32
    %c0_i32_0 = arith.constant 0 : i32
    %c0_i32_1 = arith.constant 0 : i32
    return %c0_i32, %c0_i32_0 : i32, i32
  }
  func.func @transform_7(%arg0: i32, %arg1: memref<128xi32, #tpu.memory_space<smem>>) -> (i32, i32, i32) {
    %c0_i32 = arith.constant 0 : i32
    %c0_i32_0 = arith.constant 0 : i32
    %c0_i32_1 = arith.constant 0 : i32
    return %arg0, %c0_i32, %c0_i32_0 : i32, i32, i32
  }
}

</mosaic_0001>

<llo_original>
// kernel: tpu_custom_call.1
$region0: #{tpu_custom_call.1}
  #allocation0 [shape = 'u32[]', space=smem, size = 0x4, offset = 0x4, fixed_abs, tag = 'smem constant byte address 0x4 - core index']
  #allocation1 [shape = 'u32[144,128]{1,0:T(1,128)}', space=vmem, size = 0x12000, scoped, tag = 'internal scratch']
  #allocation2 [shape = 'f32[64,128]{1,0:T(8,128)}', space=vmem, size = 0x8000, scoped, tag = 'scratch operand']
  #allocation3 [shape = 's32[1]{0}', space=sflag, size = 0x4, scoped, tag = 'scoped memory for tpu_custom_call.1']
  #allocation4 [shape = 'u8[512]{0}', space=smem, size = 0x200, scoped, tag = 'prefetched SMEM operand 0']
  %s0 = inlined_call_operand.hbm [shape: s32[128], index: 0, kind: input, shape index: {}]
  %s1 = inlined_call_operand.hbm [shape: f32[512,128], index: 1, kind: input, shape index: {}]
  %s2 = inlined_call_operand.hbm [shape: f32[16,4], index: 2, kind: input, shape index: {}]
  %s3 = inlined_call_operand.hbm [shape: f32[4,128], index: 3, kind: input, shape index: {}]
  %s4 = inlined_call_operand.hbm [shape: f32[1,128], index: 4, kind: input, shape index: {}]
  %s5 = inlined_call_operand.hbm [shape: f32[1,128], index: 5, kind: input, shape index: {}]
  %s6 = inlined_call_operand.hbm [shape: f32[1,128], index: 6, kind: input, shape index: {}]
  %s7 = inlined_call_operand.hbm [shape: bf16[128,128], index: 7, kind: input, shape index: {}]
  %s8 = inlined_call_operand.hbm [shape: f32[16,12,128], index: 8, kind: output, shape index: {}]
  %s9 = sld [smem:[#allocation0]]
  $region89: #{tpu_custom_call.1} parent=0
    _
  %s11 = ssub.s32 1, %s9
  %s12 = scalar_select 0, %s11, %s9
  %14 = dma.hbm_to_smem %s0, 16, [#allocation4], [#allocation3]
  %15 = dma.done [#allocation3], 16
  %16 = sfence
  $region1: #{tpu_custom_call.1} parent=0
    #allocation5 [shape = 'u8[262144]{0}', space=vmem, size = 0x40000, scoped, tag = 'input window, operand 1, single buffered']
    #allocation6 [shape = 's32[2]{0}', space=sflag, size = 0x8, scoped, tag = 'scoped memory for tpu_custom_call.1']
    #allocation7 [shape = 's32[2]{0}', space=sflag, size = 0x8, scoped, tag = 'scoped memory for tpu_custom_call.1']
    #allocation8 [shape = 'u8[8192]{0}', space=vmem, size = 0x2000, scoped, tag = 'input window, operand 2']
    #allocation9 [shape = 's32[2]{0}', space=sflag, size = 0x8, scoped, tag = 'scoped memory for tpu_custom_call.1']
    #allocation10 [shape = 'u8[2048]{0}', space=vmem, size = 0x800, scoped, tag = 'input window, operand 3, single buffered']
    #allocation11 [shape = 'u8[512]{0}', space=vmem, size = 0x400, scoped, tag = 'input window, operand 4, single buffered']
    #allocation12 [shape = 's32[1]{0}', space=sflag, size = 0x4, scoped, tag = 'scoped memory for tpu_custom_call.1']
    #allocation13 [shape = 'u8[512]{0}', space=vmem, size = 0x400, scoped, tag = 'input window, operand 5, single buffered']
    #allocation14 [shape = 'u8[512]{0}', space=vmem, size = 0x400, scoped, tag = 'input window, operand 6, single buffered']
    #allocation15 [shape = 's32[1]{0}', space=sflag, size = 0x4, scoped, tag = 'scoped memory for tpu_custom_call.1']
    #allocation16 [shape = 'u8[32768]{0}', space=vmem, size = 0x8000, scoped, tag = 'input window, operand 7, single buffered']
    #allocation17 [shape = 'u8[131072]{0}', space=vmem, size = 0x20000, scoped, tag = 'output window, operand 0']
    %17 = vsyncpa [#allocation6], 0
    %18 = vsyncpa [#allocation9], 0
    %s19 = scalar_lea.sflag [#allocation9], 1
    %20 = vsyncpa %s19, 0
    %21 = vsyncpa [#allocation12], 0
    %22 = vsyncpa [#allocation15], 0
    %23 = vsyncpa [#allocation7], 0
    %s24 = scalar_lea.sflag [#allocation7], 1
    %25 = vsyncpa %s24, 0
    loop: start=0, step=1, limit=4
    $region2: #{tpu_custom_call.1} parent=1 // loop_pre_header
      _
    $region3: #{tpu_custom_call.1} parent=1 // loop_header
      %s27 = sphi 0, %s31
      %p28 = scmp.ge.s32.totalorder %s27, 4
      %s35 = sphi 0, %s35
      %s37 = sphi 0, %s35
      %s38 = sphi 0, %s37
      %s52 = sphi 0, %s38
      %s58 = sphi 0, %s60
      %s61 = sphi 0, %s58
      %s62 = sphi 0, %s61
      %s78 = sphi 0, %s62
      %s82 = sphi 0, %s82
      %s84 = sphi 0, %s82
      %s85 = sphi 0, %s84
      %s99 = sphi 0, %s85
      %s103 = sphi 0, %s103
      %s105 = sphi 0, %s103
      %s106 = sphi 0, %s105
      %s120 = sphi 0, %s106
      %s124 = sphi 0, %s124
      %s126 = sphi 0, %s124
      %s127 = sphi 0, %s126
      %s141 = sphi 0, %s127
      %s145 = sphi 0, %s145
      %s147 = sphi 0, %s145
      %s148 = sphi 0, %s147
      %s162 = sphi 0, %s148
      %s166 = sphi 0, %s166
      %s168 = sphi 0, %s166
      %s169 = sphi 0, %s168
      %s183 = sphi 0, %s169
      %s189 = sphi 0, %s191
      %s192 = sphi 0, %s189
      %s193 = sphi 0, %s192
      %s209 = sphi 0, %s193
    $region4: #{tpu_custom_call.1} parent=1 // loop_header_branch
      %30 = sbr.rel (%p28) target = $region8
    $region5: #{tpu_custom_call.1} parent=1 // loop_body
      %s32 = ssub.s32 %s27, 1
      %s33 = ssub.s32 %s27, 2
      %s34 = sadd.s32 %s27, 1
      %s36 = sadd.s32 %s35, 1
      %p39 = scmp.eq.s32.totalorder %s27, 1
      %p40 = scmp.ne.s32.totalorder %s35, %s37
      %p41 = scmp.eq.s32.totalorder %s27, 0
      %p42 = por %p40, %p41
      %p43 = scmp.ne.s32.totalorder %s35, %s37
      %p44 = scmp.eq.s32.totalorder %s32, 1
      %p45 = por %p43, %p44
      %p46 = scmp.ne.s32.totalorder %s37, %s38
      %p47 = scmp.eq.s32.totalorder %s32, 0
      %p48 = por %p46, %p47
      %p49 = scmp.ne.s32.totalorder %s37, %s38
      %p50 = scmp.eq.s32.totalorder %s33, 1
      %p51 = por %p49, %p50
      %p53 = scmp.ne.s32.totalorder %s38, %s52
      %p54 = scmp.eq.s32.totalorder %s33, 0
      %p55 = por %p53, %p54
      %s56 = ssub.s32 %s27, %s34
      %p57 = scmp.eq.s32.totalorder %s56, 0
      %s59 = sadd.s32 %s58, 1
      %s60 = scalar_select %p57, %s58, %s59
      %p63 = pneg %p57
      %p64 = scmp.eq.s32.totalorder %s27, 1
      %p65 = por %p63, %p64
      %p66 = scmp.ne.s32.totalorder %s58, %s61
      %p67 = scmp.eq.s32.totalorder %s27, 0
      %p68 = por %p66, %p67
      %p69 = scmp.ne.s32.totalorder %s58, %s61
      %p70 = scmp.eq.s32.totalorder %s32, 1
      %p71 = por %p69, %p70
      %p72 = scmp.ne.s32.totalorder %s61, %s62
      %p73 = scmp.eq.s32.totalorder %s32, 0
      %p74 = por %p72, %p73
      %p75 = scmp.ne.s32.totalorder %s61, %s62
      %p76 = scmp.eq.s32.totalorder %s33, 1
      %p77 = por %p75, %p76
      %p79 = scmp.ne.s32.totalorder %s62, %s78
      %p80 = scmp.eq.s32.totalorder %s33, 0
      %p81 = por %p79, %p80
      %s83 = sadd.s32 %s82, 1
      %p86 = scmp.eq.s32.totalorder %s27, 1
      %p87 = scmp.ne.s32.totalorder %s82, %s84
      %p88 = scmp.eq.s32.totalorder %s27, 0
      %p89 = por %p87, %p88
      %p90 = scmp.ne.s32.totalorder %s82, %s84
      %p91 = scmp.eq.s32.totalorder %s32, 1
      %p92 = por %p90, %p91
      %p93 = scmp.ne.s32.totalorder %s84, %s85
      %p94 = scmp.eq.s32.totalorder %s32, 0
      %p95 = por %p93, %p94
      %p96 = scmp.ne.s32.totalorder %s84, %s85
      %p97 = scmp.eq.s32.totalorder %s33, 1
      %p98 = por %p96, %p97
      %p100 = scmp.ne.s32.totalorder %s85, %s99
      %p101 = scmp.eq.s32.totalorder %s33, 0
      %p102 = por %p100, %p101
      %s104 = sadd.s32 %s103, 1
      %p107 = scmp.eq.s32.totalorder %s27, 1
      %p108 = scmp.ne.s32.totalorder %s103, %s105
      %p109 = scmp.eq.s32.totalorder %s27, 0
      %p110 = por %p108, %p109
      %p111 = scmp.ne.s32.totalorder %s103, %s105
      %p112 = scmp.eq.s32.totalorder %s32, 1
      %p113 = por %p111, %p112
      %p114 = scmp.ne.s32.totalorder %s105, %s106
      %p115 = scmp.eq.s32.totalorder %s32, 0
      %p116 = por %p114, %p115
      %p117 = scmp.ne.s32.totalorder %s105, %s106
      %p118 = scmp.eq.s32.totalorder %s33, 1
      %p119 = por %p117, %p118
      %p121 = scmp.ne.s32.totalorder %s106, %s120
      %p122 = scmp.eq.s32.totalorder %s33, 0
      %p123 = por %p121, %p122
      %s125 = sadd.s32 %s124, 1
      %p128 = scmp.eq.s32.totalorder %s27, 1
      %p129 = scmp.ne.s32.totalorder %s124, %s126
      %p130 = scmp.eq.s32.totalorder %s27, 0
      %p131 = por %p129, %p130
      %p132 = scmp.ne.s32.totalorder %s124, %s126
      %p133 = scmp.eq.s32.totalorder %s32, 1
      %p134 = por %p132, %p133
      %p135 = scmp.ne.s32.totalorder %s126, %s127
      %p136 = scmp.eq.s32.totalorder %s32, 0
      %p137 = por %p135, %p136
      %p138 = scmp.ne.s32.totalorder %s126, %s127
      %p139 = scmp.eq.s32.totalorder %s33, 1
      %p140 = por %p138, %p139
      %p142 = scmp.ne.s32.totalorder %s127, %s141
      %p143 = scmp.eq.s32.totalorder %s33, 0
      %p144 = por %p142, %p143
      %s146 = sadd.s32 %s145, 1
      %p149 = scmp.eq.s32.totalorder %s27, 1
      %p150 = scmp.ne.s32.totalorder %s145, %s147
      %p151 = scmp.eq.s32.totalorder %s27, 0
      %p152 = por %p150, %p151
      %p153 = scmp.ne.s32.totalorder %s145, %s147
      %p154 = scmp.eq.s32.totalorder %s32, 1
      %p155 = por %p153, %p154
      %p156 = scmp.ne.s32.totalorder %s147, %s148
      %p157 = scmp.eq.s32.totalorder %s32, 0
      %p158 = por %p156, %p157
      %p159 = scmp.ne.s32.totalorder %s147, %s148
      %p160 = scmp.eq.s32.totalorder %s33, 1
      %p161 = por %p159, %p160
      %p163 = scmp.ne.s32.totalorder %s148, %s162
      %p164 = scmp.eq.s32.totalorder %s33, 0
      %p165 = por %p163, %p164
      %s167 = sadd.s32 %s166, 1
      %p170 = scmp.eq.s32.totalorder %s27, 1
      %p171 = scmp.ne.s32.totalorder %s166, %s168
      %p172 = scmp.eq.s32.totalorder %s27, 0
      %p173 = por %p171, %p172
      %p174 = scmp.ne.s32.totalorder %s166, %s168
      %p175 = scmp.eq.s32.totalorder %s32, 1
      %p176 = por %p174, %p175
      %p177 = scmp.ne.s32.totalorder %s168, %s169
      %p178 = scmp.eq.s32.totalorder %s32, 0
      %p179 = por %p177, %p178
      %p180 = scmp.ne.s32.totalorder %s168, %s169
      %p181 = scmp.eq.s32.totalorder %s33, 1
      %p182 = por %p180, %p181
      %p184 = scmp.ne.s32.totalorder %s169, %s183
      %p185 = scmp.eq.s32.totalorder %s33, 0
      %p186 = por %p184, %p185
      %s187 = ssub.s32 %s27, %s34
      %p188 = scmp.eq.s32.totalorder %s187, 0
      %s190 = sadd.s32 %s189, 1
      %s191 = scalar_select %p188, %s189, %s190
      %p194 = pneg %p188
      %p195 = scmp.eq.s32.totalorder %s27, 1
      %p196 = por %p194, %p195
      %p197 = scmp.ne.s32.totalorder %s189, %s192
      %p198 = scmp.eq.s32.totalorder %s27, 0
      %p199 = por %p197, %p198
      %p200 = scmp.ne.s32.totalorder %s189, %s192
      %p201 = scmp.eq.s32.totalorder %s32, 1
      %p202 = por %p200, %p201
      %p203 = scmp.ne.s32.totalorder %s192, %s193
      %p204 = scmp.eq.s32.totalorder %s32, 0
      %p205 = por %p203, %p204
      %p206 = scmp.ne.s32.totalorder %s192, %s193
      %p207 = scmp.eq.s32.totalorder %s33, 1
      %p208 = por %p206, %p207
      %p210 = scmp.ne.s32.totalorder %s193, %s209
      %p211 = scmp.eq.s32.totalorder %s33, 0
      %p212 = por %p210, %p211
      %p213 = scmp.le.s32.totalorder 1, %s27
      %p214 = scmp.lt.s32.totalorder %s27, 3
      %p215 = pnand %p213, %p214
      %p216 = pneg %p215
      // Predicated region
      $region9: #{tpu_custom_call.1} parent=5 // pred_check
        _
      $region10: #{tpu_custom_call.1} parent=5 // pred_check_branch
        %218 = sbr.rel (%p215) target = $region12
      $region11: #{tpu_custom_call.1} parent=5 // pred_region
        %s219 = ssub.s32 %s27, 1
        // Predicated region
        $region13: #{tpu_custom_call.1} parent=11 // pred_check
          %p220 = pneg %p48
        $region14: #{tpu_custom_call.1} parent=11 // pred_check_branch
          %222 = sbr.rel (%p220) target = $region16
        $region15: #{tpu_custom_call.1} parent=11 // pred_region
          %s224 = ssub.s32 8192, 8192
          %225 = vsyncadd [#allocation6], %s224
          %s226 = sshll.u32 [#allocation5], 4
          %s227 = int_to_ptr.vmem [resolvable:$true] %s226
          %232 = dma.hbm_to_vmem [thread:$0]  %s1, 8192, %s227, [#allocation6], 128, 128, 8
        $region16: #{tpu_custom_call.1} parent=11 // pred_fallthru
          _
        // Predicated region
        $region17: #{tpu_custom_call.1} parent=11 // pred_check
          %p233 = pneg %p95
        $region18: #{tpu_custom_call.1} parent=11 // pred_check_branch
          %235 = sbr.rel (%p233) target = $region20
        $region19: #{tpu_custom_call.1} parent=11 // pred_region
          %s237 = ssub.s32 64, 64
          %238 = vsyncadd [#allocation9], %s237
          %s240 = sshll.u32 [#allocation10], 4
          %s241 = int_to_ptr.vmem [resolvable:$true] %s240
          %243 = dma.hbm_to_vmem [thread:$0]  %s3, 64, %s241, [#allocation9]
        $region20: #{tpu_custom_call.1} parent=11 // pred_fallthru
          _
        // Predicated region
        $region21: #{tpu_custom_call.1} parent=11 // pred_check
          %p244 = pneg %p116
        $region22: #{tpu_custom_call.1} parent=11 // pred_check_branch
          %246 = sbr.rel (%p244) target = $region24
        $region23: #{tpu_custom_call.1} parent=11 // pred_region
          %s248 = ssub.s32 16, 16
          %249 = vsyncadd [#allocation12], %s248
          %s251 = sshll.u32 [#allocation11], 4
          %s252 = int_to_ptr.vmem [resolvable:$true] %s251
          %254 = dma.hbm_to_vmem [thread:$0]  %s4, 16, %s252, [#allocation12]
        $region24: #{tpu_custom_call.1} parent=11 // pred_fallthru
          _
        // Predicated region
        $region25: #{tpu_custom_call.1} parent=11 // pred_check
          %p255 = pneg %p137
        $region26: #{tpu_custom_call.1} parent=11 // pred_check_branch
          %257 = sbr.rel (%p255) target = $region28
        $region27: #{tpu_custom_call.1} parent=11 // pred_region
          %s259 = ssub.s32 16, 16
          %260 = vsyncadd [#allocation12], %s259
          %s262 = sshll.u32 [#allocation13], 4
          %s263 = int_to_ptr.vmem [resolvable:$true] %s262
          %265 = dma.hbm_to_vmem [thread:$0]  %s5, 16, %s263, [#allocation12]
        $region28: #{tpu_custom_call.1} parent=11 // pred_fallthru
          _
        // Predicated region
        $region29: #{tpu_custom_call.1} parent=11 // pred_check
          %p266 = pneg %p158
        $region30: #{tpu_custom_call.1} parent=11 // pred_check_branch
          %268 = sbr.rel (%p266) target = $region32
        $region31: #{tpu_custom_call.1} parent=11 // pred_region
          %s270 = ssub.s32 16, 16
          %271 = vsyncadd [#allocation15], %s270
          %s273 = sshll.u32 [#allocation14], 4
          %s274 = int_to_ptr.vmem [resolvable:$true] %s273
          %276 = dma.hbm_to_vmem [thread:$0]  %s6, 16, %s274, [#allocation15]
        $region32: #{tpu_custom_call.1} parent=11 // pred_fallthru
          _
        // Predicated region
        $region33: #{tpu_custom_call.1} parent=11 // pred_check
          %p277 = pneg %p179
        $region34: #{tpu_custom_call.1} parent=11 // pred_check_branch
          %279 = sbr.rel (%p277) target = $region36
        $region35: #{tpu_custom_call.1} parent=11 // pred_region
          %s281 = ssub.s32 1024, 1024
          %282 = vsyncadd [#allocation15], %s281
          %s283 = sshll.u32 [#allocation16], 4
          %s284 = int_to_ptr.vmem [resolvable:$true] %s283
          %289 = dma.hbm_to_vmem [thread:$0]  %s7, 1024, %s284, [#allocation15], 64, 64, 4
        $region36: #{tpu_custom_call.1} parent=11 // pred_fallthru
          _
      $region12: #{tpu_custom_call.1} parent=5 // pred_fallthru
        _
      %p290 = scmp.lt.s32.totalorder %s27, 2
      // Predicated region
      $region37: #{tpu_custom_call.1} parent=5 // pred_check
        %p291 = pneg %p290
      $region38: #{tpu_custom_call.1} parent=5 // pred_check_branch
        %293 = sbr.rel (%p291) target = $region40
      $region39: #{tpu_custom_call.1} parent=5 // pred_region
        // Predicated region
        $region41: #{tpu_custom_call.1} parent=39 // pred_check
          %p294 = pneg %p68
        $region42: #{tpu_custom_call.1} parent=39 // pred_check_branch
          %296 = sbr.rel (%p294) target = $region44
        $region43: #{tpu_custom_call.1} parent=39 // pred_region
          %s297 = sand.u32 %s27, 1
          %s298 = scalar_lea.sflag [#allocation9], %s297
          %s299 = sand.u32 %s58, 1
          %s300 = smul.addr %s299, 8
          %s301 = scalar_lea.vmem [#allocation8], %s300
          %s303 = ssub.s32 128, 128
          %304 = vsyncadd %s298, %s303
          %s305 = smul.addr %s27, 128
          %s306 = scalar_lea.hbm %s2, %s305
          %s308 = sshll.u32 %s301, 4
          %s309 = int_to_ptr.vmem [resolvable:$true] %s308
          %311 = dma.hbm_to_vmem [thread:$0]  %s306, 128, %s309, %s298
        $region44: #{tpu_custom_call.1} parent=39 // pred_fallthru
          _
      $region40: #{tpu_custom_call.1} parent=5 // pred_fallthru
        _
      %p312 = scmp.le.s32.totalorder 1, %s27
      %p313 = scmp.lt.s32.totalorder %s27, 3
      %p314 = pnand %p312, %p313
      %p315 = pneg %p314
      // Predicated region
      $region45: #{tpu_custom_call.1} parent=5 // pred_check
        _
      $region46: #{tpu_custom_call.1} parent=5 // pred_check_branch
        %317 = sbr.rel (%p314) target = $region48
      $region47: #{tpu_custom_call.1} parent=5 // pred_region
        %s318 = ssub.s32 %s27, 1
        // Predicated region
        $region49: #{tpu_custom_call.1} parent=47 // pred_check
          %p319 = pneg %p48
        $region50: #{tpu_custom_call.1} parent=47 // pred_check_branch
          %321 = sbr.rel (%p319) target = $region52
        $region51: #{tpu_custom_call.1} parent=47 // pred_region
          %322 = dma.done [#allocation6], 8192
        $region52: #{tpu_custom_call.1} parent=47 // pred_fallthru
          _
        %s323 = sand.u32 %s32, 1
        %s324 = scalar_lea.sflag [#allocation9], %s323
        %s325 = sand.u32 %s61, 1
        %s326 = smul.addr %s325, 8
        %s327 = scalar_lea.vmem [#allocation8], %s326
        // Predicated region
        $region53: #{tpu_custom_call.1} parent=47 // pred_check
          %p328 = pneg %p74
        $region54: #{tpu_custom_call.1} parent=47 // pred_check_branch
          %330 = sbr.rel (%p328) target = $region56
        $region55: #{tpu_custom_call.1} parent=47 // pred_region
          %331 = dma.done %s324, 128
        $region56: #{tpu_custom_call.1} parent=47 // pred_fallthru
          _
        // Predicated region
        $region57: #{tpu_custom_call.1} parent=47 // pred_check
          %p332 = pneg %p95
        $region58: #{tpu_custom_call.1} parent=47 // pred_check_branch
          %334 = sbr.rel (%p332) target = $region60
        $region59: #{tpu_custom_call.1} parent=47 // pred_region
          %335 = dma.done [#allocation9], 64
        $region60: #{tpu_custom_call.1} parent=47 // pred_fallthru
          _
        // Predicated region
        $region61: #{tpu_custom_call.1} parent=47 // pred_check
          %p336 = pneg %p116
        $region62: #{tpu_custom_call.1} parent=47 // pred_check_branch
          %338 = sbr.rel (%p336) target = $region64
        $region63: #{tpu_custom_call.1} parent=47 // pred_region
          %339 = dma.done [#allocation12], 16
        $region64: #{tpu_custom_call.1} parent=47 // pred_fallthru
          _
        // Predicated region
        $region65: #{tpu_custom_call.1} parent=47 // pred_check
          %p340 = pneg %p137
        $region66: #{tpu_custom_call.1} parent=47 // pred_check_branch
          %342 = sbr.rel (%p340) target = $region68
        $region67: #{tpu_custom_call.1} parent=47 // pred_region
          %343 = dma.done [#allocation12], 16
        $region68: #{tpu_custom_call.1} parent=47 // pred_fallthru
          _
        // Predicated region
        $region69: #{tpu_custom_call.1} parent=47 // pred_check
          %p344 = pneg %p158
        $region70: #{tpu_custom_call.1} parent=47 // pred_check_branch
          %346 = sbr.rel (%p344) target = $region72
        $region71: #{tpu_custom_call.1} parent=47 // pred_region
          %347 = dma.done [#allocation15], 16
        $region72: #{tpu_custom_call.1} parent=47 // pred_fallthru
          _
        // Predicated region
        $region73: #{tpu_custom_call.1} parent=47 // pred_check
          %p348 = pneg %p179
        $region74: #{tpu_custom_call.1} parent=47 // pred_check_branch
          %350 = sbr.rel (%p348) target = $region76
        $region75: #{tpu_custom_call.1} parent=47 // pred_region
          %351 = dma.done [#allocation15], 1024
        $region76: #{tpu_custom_call.1} parent=47 // pred_fallthru
          _
        %p352 = pneg %p48
        %p353 = pneg %p45
        %s354 = sand.u32 %s32, 1
        %s355 = scalar_lea.sflag [#allocation9], %s354
        %s356 = sand.u32 %s61, 1
        %s357 = smul.addr %s356, 8
        %s358 = scalar_lea.vmem [#allocation8], %s357
        %p359 = pneg %p74
        %p360 = pneg %p71
        %p361 = pneg %p95
        %p362 = pneg %p92
        %p363 = pneg %p116
        %p364 = pneg %p113
        %p365 = pneg %p137
        %p366 = pneg %p134
        %p367 = pneg %p158
        %p368 = pneg %p155
        %p369 = pneg %p179
        %p370 = pneg %p176
        %p371 = pneg %p205
        %p372 = pneg %p202
        %s373 = sand.u32 %s192, 1
        %s374 = scalar_lea.sflag [#allocation7], %s373
        %s375 = sand.u32 %s192, 1
        %s376 = smul.addr %s375, 128
        %s377 = scalar_lea.vmem [#allocation17], %s376
        %s378 = smul.u32 8, %s32
        %s380 = smul.u32 %s32, 64
        %s381 = sld [smem:[#allocation4 + %s380]]
        %p382 = scmp.gt.s32.totalorder %s381, 0
        %s383 = scalar_select %p382, %s381, 0
        %p384 = scmp.lt.s32.totalorder %s383, 511
        %s385 = scalar_select %p384, %s383, 511
        %s386 = scalar_lea.vmem [#allocation5], %s385
        %v387 = vld [vmem:[%s386] sm:$0x1]
        %388 = vst [vmem:[#allocation2] sm:$0x1] %v387
        %s389 = sadd.s32 %s380, 1
        %s390 = sld [smem:[#allocation4 + %s389]]
        %p391 = scmp.gt.s32.totalorder %s390, 0
        %s392 = scalar_select %p391, %s390, 0
        %p393 = scmp.lt.s32.totalorder %s392, 511
        %s394 = scalar_select %p393, %s392, 511
        %s395 = scalar_lea.vmem [#allocation5], %s394
        %v396 = vld [vmem:[%s395] sm:$0x1]
        %397 = vst [vmem:[#allocation2 + $0x1] sm:$0x1] %v396
        %s398 = sadd.s32 %s380, 2
        %s399 = sld [smem:[#allocation4 + %s398]]
        %p400 = scmp.gt.s32.totalorder %s399, 0
        %s401 = scalar_select %p400, %s399, 0
        %p402 = scmp.lt.s32.totalorder %s401, 511
        %s403 = scalar_select %p402, %s401, 511
        %s404 = scalar_lea.vmem [#allocation5], %s403
        %v405 = vld [vmem:[%s404] sm:$0x1]
        %406 = vst [vmem:[#allocation2 + $0x2] sm:$0x1] %v405
        %s407 = sadd.s32 %s380, 3
        %s408 = sld [smem:[#allocation4 + %s407]]
        %p409 = scmp.gt.s32.totalorder %s408, 0
        %s410 = scalar_select %p409, %s408, 0
        %p411 = scmp.lt.s32.totalorder %s410, 511
        %s412 = scalar_select %p411, %s410, 511
        %s413 = scalar_lea.vmem [#allocation5], %s412
        %v414 = vld [vmem:[%s413] sm:$0x1]
        %415 = vst [vmem:[#allocation2 + $0x3] sm:$0x1] %v414
        %s416 = sadd.s32 %s380, 4
        %s417 = sld [smem:[#allocation4 + %s416]]
        %p418 = scmp.gt.s32.totalorder %s417, 0
        %s419 = scalar_select %p418, %s417, 0
        %p420 = scmp.lt.s32.totalorder %s419, 511
        %s421 = scalar_select %p420, %s419, 511
        %s422 = scalar_lea.vmem [#allocation5], %s421
        %v423 = vld [vmem:[%s422] sm:$0x1]
        %424 = vst [vmem:[#allocation2 + $0x4] sm:$0x1] %v423
        %s425 = sadd.s32 %s380, 5
        %s426 = sld [smem:[#allocation4 + %s425]]
        %p427 = scmp.gt.s32.totalorder %s426, 0
        %s428 = scalar_select %p427, %s426, 0
        %p429 = scmp.lt.s32.totalorder %s428, 511
        %s430 = scalar_select %p429, %s428, 511
        %s431 = scalar_lea.vmem [#allocation5], %s430
        %v432 = vld [vmem:[%s431] sm:$0x1]
        %433 = vst [vmem:[#allocation2 + $0x5] sm:$0x1] %v432
        %s434 = sadd.s32 %s380, 6
        %s435 = sld [smem:[#allocation4 + %s434]]
        %p436 = scmp.gt.s32.totalorder %s435, 0
        %s437 = scalar_select %p436, %s435, 0
        %p438 = scmp.lt.s32.totalorder %s437, 511
        %s439 = scalar_select %p438, %s437, 511
        %s440 = scalar_lea.vmem [#allocation5], %s439
        %v441 = vld [vmem:[%s440] sm:$0x1]
        %442 = vst [vmem:[#allocation2 + $0x6] sm:$0x1] %v441
        %s443 = sadd.s32 %s380, 7
        %s444 = sld [smem:[#allocation4 + %s443]]
        %p445 = scmp.gt.s32.totalorder %s444, 0
        %s446 = scalar_select %p445, %s444, 0
        %p447 = scmp.lt.s32.totalorder %s446, 511
        %s448 = scalar_select %p447, %s446, 511
        %s449 = scalar_lea.vmem [#allocation5], %s448
        %v450 = vld [vmem:[%s449] sm:$0x1]
        %451 = vst [vmem:[#allocation2 + $0x7] sm:$0x1] %v450
        %s452 = sadd.s32 %s380, 8
        %s453 = sld [smem:[#allocation4 + %s452]]
        %p454 = scmp.gt.s32.totalorder %s453, 0
        %s455 = scalar_select %p454, %s453, 0
        %p456 = scmp.lt.s32.totalorder %s455, 511
        %s457 = scalar_select %p456, %s455, 511
        %s458 = scalar_lea.vmem [#allocation5], %s457
        %v459 = vld [vmem:[%s458] sm:$0x1]
        %460 = vst [vmem:[#allocation2 + $0x8] sm:$0x1] %v459
        %s461 = sadd.s32 %s380, 9
        %s462 = sld [smem:[#allocation4 + %s461]]
        %p463 = scmp.gt.s32.totalorder %s462, 0
        %s464 = scalar_select %p463, %s462, 0
        %p465 = scmp.lt.s32.totalorder %s464, 511
        %s466 = scalar_select %p465, %s464, 511
        %s467 = scalar_lea.vmem [#allocation5], %s466
        %v468 = vld [vmem:[%s467] sm:$0x1]
        %469 = vst [vmem:[#allocation2 + $0x9] sm:$0x1] %v468
        %s470 = sadd.s32 %s380, 10
        %s471 = sld [smem:[#allocation4 + %s470]]
        %p472 = scmp.gt.s32.totalorder %s471, 0
        %s473 = scalar_select %p472, %s471, 0
        %p474 = scmp.lt.s32.totalorder %s473, 511
        %s475 = scalar_select %p474, %s473, 511
        %s476 = scalar_lea.vmem [#allocation5], %s475
        %v477 = vld [vmem:[%s476] sm:$0x1]
        %478 = vst [vmem:[#allocation2 + $0xa] sm:$0x1] %v477
        %s479 = sadd.s32 %s380, 11
        %s480 = sld [smem:[#allocation4 + %s479]]
        %p481 = scmp.gt.s32.totalorder %s480, 0
        %s482 = scalar_select %p481, %s480, 0
        %p483 = scmp.lt.s32.totalorder %s482, 511
        %s484 = scalar_select %p483, %s482, 511
        %s485 = scalar_lea.vmem [#allocation5], %s484
        %v486 = vld [vmem:[%s485] sm:$0x1]
        %487 = vst [vmem:[#allocation2 + $0xb] sm:$0x1] %v486
        %s488 = sadd.s32 %s380, 12
        %s489 = sld [smem:[#allocation4 + %s488]]
        %p490 = scmp.gt.s32.totalorder %s489, 0
        %s491 = scalar_select %p490, %s489, 0
        %p492 = scmp.lt.s32.totalorder %s491, 511
        %s493 = scalar_select %p492, %s491, 511
        %s494 = scalar_lea.vmem [#allocation5], %s493
        %v495 = vld [vmem:[%s494] sm:$0x1]
        %496 = vst [vmem:[#allocation2 + $0xc] sm:$0x1] %v495
        %s497 = sadd.s32 %s380, 13
        %s498 = sld [smem:[#allocation4 + %s497]]
        %p499 = scmp.gt.s32.totalorder %s498, 0
        %s500 = scalar_select %p499, %s498, 0
        %p501 = scmp.lt.s32.totalorder %s500, 511
        %s502 = scalar_select %p501, %s500, 511
        %s503 = scalar_lea.vmem [#allocation5], %s502
        %v504 = vld [vmem:[%s503] sm:$0x1]
        %505 = vst [vmem:[#allocation2 + $0xd] sm:$0x1] %v504
        %s506 = sadd.s32 %s380, 14
        %s507 = sld [smem:[#allocation4 + %s506]]
        %p508 = scmp.gt.s32.totalorder %s507, 0
        %s509 = scalar_select %p508, %s507, 0
        %p510 = scmp.lt.s32.totalorder %s509, 511
        %s511 = scalar_select %p510, %s509, 511
        %s512 = scalar_lea.vmem [#allocation5], %s511
        %v513 = vld [vmem:[%s512] sm:$0x1]
        %514 = vst [vmem:[#allocation2 + $0xe] sm:$0x1] %v513
        %s515 = sadd.s32 %s380, 15
        %s516 = sld [smem:[#allocation4 + %s515]]
        %p517 = scmp.gt.s32.totalorder %s516, 0
        %s518 = scalar_select %p517, %s516, 0
        %p519 = scmp.lt.s32.totalorder %s518, 511
        %s520 = scalar_select %p519, %s518, 511
        %s521 = scalar_lea.vmem [#allocation5], %s520
        %v522 = vld [vmem:[%s521] sm:$0x1]
        %523 = vst [vmem:[#allocation2 + $0xf] sm:$0x1] %v522
        %s524 = sadd.s32 %s380, 16
        %s525 = sld [smem:[#allocation4 + %s524]]
        %p526 = scmp.gt.s32.totalorder %s525, 0
        %s527 = scalar_select %p526, %s525, 0
        %p528 = scmp.lt.s32.totalorder %s527, 511
        %s529 = scalar_select %p528, %s527, 511
        %s530 = scalar_lea.vmem [#allocation5], %s529
        %v531 = vld [vmem:[%s530] sm:$0x1]
        %532 = vst [vmem:[#allocation2 + $0x10] sm:$0x1] %v531
        %s533 = sadd.s32 %s380, 17
        %s534 = sld [smem:[#allocation4 + %s533]]
        %p535 = scmp.gt.s32.totalorder %s534, 0
        %s536 = scalar_select %p535, %s534, 0
        %p537 = scmp.lt.s32.totalorder %s536, 511
        %s538 = scalar_select %p537, %s536, 511
        %s539 = scalar_lea.vmem [#allocation5], %s538
        %v540 = vld [vmem:[%s539] sm:$0x1]
        %541 = vst [vmem:[#allocation2 + $0x11] sm:$0x1] %v540
        %s542 = sadd.s32 %s380, 18
        %s543 = sld [smem:[#allocation4 + %s542]]
        %p544 = scmp.gt.s32.totalorder %s543, 0
        %s545 = scalar_select %p544, %s543, 0
        %p546 = scmp.lt.s32.totalorder %s545, 511
        %s547 = scalar_select %p546, %s545, 511
        %s548 = scalar_lea.vmem [#allocation5], %s547
        %v549 = vld [vmem:[%s548] sm:$0x1]
        %550 = vst [vmem:[#allocation2 + $0x12] sm:$0x1] %v549
        %s551 = sadd.s32 %s380, 19
        %s552 = sld [smem:[#allocation4 + %s551]]
        %p553 = scmp.gt.s32.totalorder %s552, 0
        %s554 = scalar_select %p553, %s552, 0
        %p555 = scmp.lt.s32.totalorder %s554, 511
        %s556 = scalar_select %p555, %s554, 511
        %s557 = scalar_lea.vmem [#allocation5], %s556
        %v558 = vld [vmem:[%s557] sm:$0x1]
        %559 = vst [vmem:[#allocation2 + $0x13] sm:$0x1] %v558
        %s560 = sadd.s32 %s380, 20
        %s561 = sld [smem:[#allocation4 + %s560]]
        %p562 = scmp.gt.s32.totalorder %s561, 0
        %s563 = scalar_select %p562, %s561, 0
        %p564 = scmp.lt.s32.totalorder %s563, 511
        %s565 = scalar_select %p564, %s563, 511
        %s566 = scalar_lea.vmem [#allocation5], %s565
        %v567 = vld [vmem:[%s566] sm:$0x1]
        %568 = vst [vmem:[#allocation2 + $0x14] sm:$0x1] %v567
        %s569 = sadd.s32 %s380, 21
        %s570 = sld [smem:[#allocation4 + %s569]]
        %p571 = scmp.gt.s32.totalorder %s570, 0
        %s572 = scalar_select %p571, %s570, 0
        %p573 = scmp.lt.s32.totalorder %s572, 511
        %s574 = scalar_select %p573, %s572, 511
        %s575 = scalar_lea.vmem [#allocation5], %s574
        %v576 = vld [vmem:[%s575] sm:$0x1]
        %577 = vst [vmem:[#allocation2 + $0x15] sm:$0x1] %v576
        %s578 = sadd.s32 %s380, 22
        %s579 = sld [smem:[#allocation4 + %s578]]
        %p580 = scmp.gt.s32.totalorder %s579, 0
        %s581 = scalar_select %p580, %s579, 0
        %p582 = scmp.lt.s32.totalorder %s581, 511
        %s583 = scalar_select %p582, %s581, 511
        %s584 = scalar_lea.vmem [#allocation5], %s583
        %v585 = vld [vmem:[%s584] sm:$0x1]
        %586 = vst [vmem:[#allocation2 + $0x16] sm:$0x1] %v585
        %s587 = sadd.s32 %s380, 23
        %s588 = sld [smem:[#allocation4 + %s587]]
        %p589 = scmp.gt.s32.totalorder %s588, 0
        %s590 = scalar_select %p589, %s588, 0
        %p591 = scmp.lt.s32.totalorder %s590, 511
        %s592 = scalar_select %p591, %s590, 511
        %s593 = scalar_lea.vmem [#allocation5], %s592
        %v594 = vld [vmem:[%s593] sm:$0x1]
        %595 = vst [vmem:[#allocation2 + $0x17] sm:$0x1] %v594
        %s596 = sadd.s32 %s380, 24
        %s597 = sld [smem:[#allocation4 + %s596]]
        %p598 = scmp.gt.s32.totalorder %s597, 0
        %s599 = scalar_select %p598, %s597, 0
        %p600 = scmp.lt.s32.totalorder %s599, 511
        %s601 = scalar_select %p600, %s599, 511
        %s602 = scalar_lea.vmem [#allocation5], %s601
        %v603 = vld [vmem:[%s602] sm:$0x1]
        %604 = vst [vmem:[#allocation2 + $0x18] sm:$0x1] %v603
        %s605 = sadd.s32 %s380, 25
        %s606 = sld [smem:[#allocation4 + %s605]]
        %p607 = scmp.gt.s32.totalorder %s606, 0
        %s608 = scalar_select %p607, %s606, 0
        %p609 = scmp.lt.s32.totalorder %s608, 511
        %s610 = scalar_select %p609, %s608, 511
        %s611 = scalar_lea.vmem [#allocation5], %s610
        %v612 = vld [vmem:[%s611] sm:$0x1]
        %613 = vst [vmem:[#allocation2 + $0x19] sm:$0x1] %v612
        %s614 = sadd.s32 %s380, 26
        %s615 = sld [smem:[#allocation4 + %s614]]
        %p616 = scmp.gt.s32.totalorder %s615, 0
        %s617 = scalar_select %p616, %s615, 0
        %p618 = scmp.lt.s32.totalorder %s617, 511
        %s619 = scalar_select %p618, %s617, 511
        %s620 = scalar_lea.vmem [#allocation5], %s619
        %v621 = vld [vmem:[%s620] sm:$0x1]
        %622 = vst [vmem:[#allocation2 + $0x1a] sm:$0x1] %v621
        %s623 = sadd.s32 %s380, 27
        %s624 = sld [smem:[#allocation4 + %s623]]
        %p625 = scmp.gt.s32.totalorder %s624, 0
        %s626 = scalar_select %p625, %s624, 0
        %p627 = scmp.lt.s32.totalorder %s626, 511
        %s628 = scalar_select %p627, %s626, 511
        %s629 = scalar_lea.vmem [#allocation5], %s628
        %v630 = vld [vmem:[%s629] sm:$0x1]
        %631 = vst [vmem:[#allocation2 + $0x1b] sm:$0x1] %v630
        %s632 = sadd.s32 %s380, 28
        %s633 = sld [smem:[#allocation4 + %s632]]
        %p634 = scmp.gt.s32.totalorder %s633, 0
        %s635 = scalar_select %p634, %s633, 0
        %p636 = scmp.lt.s32.totalorder %s635, 511
        %s637 = scalar_select %p636, %s635, 511
        %s638 = scalar_lea.vmem [#allocation5], %s637
        %v639 = vld [vmem:[%s638] sm:$0x1]
        %640 = vst [vmem:[#allocation2 + $0x1c] sm:$0x1] %v639
        %s641 = sadd.s32 %s380, 29
        %s642 = sld [smem:[#allocation4 + %s641]]
        %p643 = scmp.gt.s32.totalorder %s642, 0
        %s644 = scalar_select %p643, %s642, 0
        %p645 = scmp.lt.s32.totalorder %s644, 511
        %s646 = scalar_select %p645, %s644, 511
        %s647 = scalar_lea.vmem [#allocation5], %s646
        %v648 = vld [vmem:[%s647] sm:$0x1]
        %649 = vst [vmem:[#allocation2 + $0x1d] sm:$0x1] %v648
        %s650 = sadd.s32 %s380, 30
        %s651 = sld [smem:[#allocation4 + %s650]]
        %p652 = scmp.gt.s32.totalorder %s651, 0
        %s653 = scalar_select %p652, %s651, 0
        %p654 = scmp.lt.s32.totalorder %s653, 511
        %s655 = scalar_select %p654, %s653, 511
        %s656 = scalar_lea.vmem [#allocation5], %s655
        %v657 = vld [vmem:[%s656] sm:$0x1]
        %658 = vst [vmem:[#allocation2 + $0x1e] sm:$0x1] %v657
        %s659 = sadd.s32 %s380, 31
        %s660 = sld [smem:[#allocation4 + %s659]]
        %p661 = scmp.gt.s32.totalorder %s660, 0
        %s662 = scalar_select %p661, %s660, 0
        %p663 = scmp.lt.s32.totalorder %s662, 511
        %s664 = scalar_select %p663, %s662, 511
        %s665 = scalar_lea.vmem [#allocation5], %s664
        %v666 = vld [vmem:[%s665] sm:$0x1]
        %667 = vst [vmem:[#allocation2 + $0x1f] sm:$0x1] %v666
        %s668 = sadd.s32 %s380, 32
        %s669 = sld [smem:[#allocation4 + %s668]]
        %p670 = scmp.gt.s32.totalorder %s669, 0
        %s671 = scalar_select %p670, %s669, 0
        %p672 = scmp.lt.s32.totalorder %s671, 511
        %s673 = scalar_select %p672, %s671, 511
        %s674 = scalar_lea.vmem [#allocation5], %s673
        %v675 = vld [vmem:[%s674] sm:$0x1]
        %676 = vst [vmem:[#allocation2 + $0x20] sm:$0x1] %v675
        %s677 = sadd.s32 %s380, 33
        %s678 = sld [smem:[#allocation4 + %s677]]
        %p679 = scmp.gt.s32.totalorder %s678, 0
        %s680 = scalar_select %p679, %s678, 0
        %p681 = scmp.lt.s32.totalorder %s680, 511
        %s682 = scalar_select %p681, %s680, 511
        %s683 = scalar_lea.vmem [#allocation5], %s682
        %v684 = vld [vmem:[%s683] sm:$0x1]
        %685 = vst [vmem:[#allocation2 + $0x21] sm:$0x1] %v684
        %s686 = sadd.s32 %s380, 34
        %s687 = sld [smem:[#allocation4 + %s686]]
        %p688 = scmp.gt.s32.totalorder %s687, 0
        %s689 = scalar_select %p688, %s687, 0
        %p690 = scmp.lt.s32.totalorder %s689, 511
        %s691 = scalar_select %p690, %s689, 511
        %s692 = scalar_lea.vmem [#allocation5], %s691
        %v693 = vld [vmem:[%s692] sm:$0x1]
        %694 = vst [vmem:[#allocation2 + $0x22] sm:$0x1] %v693
        %s695 = sadd.s32 %s380, 35
        %s696 = sld [smem:[#allocation4 + %s695]]
        %p697 = scmp.gt.s32.totalorder %s696, 0
        %s698 = scalar_select %p697, %s696, 0
        %p699 = scmp.lt.s32.totalorder %s698, 511
        %s700 = scalar_select %p699, %s698, 511
        %s701 = scalar_lea.vmem [#allocation5], %s700
        %v702 = vld [vmem:[%s701] sm:$0x1]
        %703 = vst [vmem:[#allocation2 + $0x23] sm:$0x1] %v702
        %s704 = sadd.s32 %s380, 36
        %s705 = sld [smem:[#allocation4 + %s704]]
        %p706 = scmp.gt.s32.totalorder %s705, 0
        %s707 = scalar_select %p706, %s705, 0
        %p708 = scmp.lt.s32.totalorder %s707, 511
        %s709 = scalar_select %p708, %s707, 511
        %s710 = scalar_lea.vmem [#allocation5], %s709
        %v711 = vld [vmem:[%s710] sm:$0x1]
        %712 = vst [vmem:[#allocation2 + $0x24] sm:$0x1] %v711
        %s713 = sadd.s32 %s380, 37
        %s714 = sld [smem:[#allocation4 + %s713]]
        %p715 = scmp.gt.s32.totalorder %s714, 0
        %s716 = scalar_select %p715, %s714, 0
        %p717 = scmp.lt.s32.totalorder %s716, 511
        %s718 = scalar_select %p717, %s716, 511
        %s719 = scalar_lea.vmem [#allocation5], %s718
        %v720 = vld [vmem:[%s719] sm:$0x1]
        %721 = vst [vmem:[#allocation2 + $0x25] sm:$0x1] %v720
        %s722 = sadd.s32 %s380, 38
        %s723 = sld [smem:[#allocation4 + %s722]]
        %p724 = scmp.gt.s32.totalorder %s723, 0
        %s725 = scalar_select %p724, %s723, 0
        %p726 = scmp.lt.s32.totalorder %s725, 511
        %s727 = scalar_select %p726, %s725, 511
        %s728 = scalar_lea.vmem [#allocation5], %s727
        %v729 = vld [vmem:[%s728] sm:$0x1]
        %730 = vst [vmem:[#allocation2 + $0x26] sm:$0x1] %v729
        %s731 = sadd.s32 %s380, 39
        %s732 = sld [smem:[#allocation4 + %s731]]
        %p733 = scmp.gt.s32.totalorder %s732, 0
        %s734 = scalar_select %p733, %s732, 0
        %p735 = scmp.lt.s32.totalorder %s734, 511
        %s736 = scalar_select %p735, %s734, 511
        %s737 = scalar_lea.vmem [#allocation5], %s736
        %v738 = vld [vmem:[%s737] sm:$0x1]
        %739 = vst [vmem:[#allocation2 + $0x27] sm:$0x1] %v738
        %s740 = sadd.s32 %s380, 40
        %s741 = sld [smem:[#allocation4 + %s740]]
        %p742 = scmp.gt.s32.totalorder %s741, 0
        %s743 = scalar_select %p742, %s741, 0
        %p744 = scmp.lt.s32.totalorder %s743, 511
        %s745 = scalar_select %p744, %s743, 511
        %s746 = scalar_lea.vmem [#allocation5], %s745
        %v747 = vld [vmem:[%s746] sm:$0x1]
        %748 = vst [vmem:[#allocation2 + $0x28] sm:$0x1] %v747
        %s749 = sadd.s32 %s380, 41
        %s750 = sld [smem:[#allocation4 + %s749]]
        %p751 = scmp.gt.s32.totalorder %s750, 0
        %s752 = scalar_select %p751, %s750, 0
        %p753 = scmp.lt.s32.totalorder %s752, 511
        %s754 = scalar_select %p753, %s752, 511
        %s755 = scalar_lea.vmem [#allocation5], %s754
        %v756 = vld [vmem:[%s755] sm:$0x1]
        %757 = vst [vmem:[#allocation2 + $0x29] sm:$0x1] %v756
        %s758 = sadd.s32 %s380, 42
        %s759 = sld [smem:[#allocation4 + %s758]]
        %p760 = scmp.gt.s32.totalorder %s759, 0
        %s761 = scalar_select %p760, %s759, 0
        %p762 = scmp.lt.s32.totalorder %s761, 511
        %s763 = scalar_select %p762, %s761, 511
        %s764 = scalar_lea.vmem [#allocation5], %s763
        %v765 = vld [vmem:[%s764] sm:$0x1]
        %766 = vst [vmem:[#allocation2 + $0x2a] sm:$0x1] %v765
        %s767 = sadd.s32 %s380, 43
        %s768 = sld [smem:[#allocation4 + %s767]]
        %p769 = scmp.gt.s32.totalorder %s768, 0
        %s770 = scalar_select %p769, %s768, 0
        %p771 = scmp.lt.s32.totalorder %s770, 511
        %s772 = scalar_select %p771, %s770, 511
        %s773 = scalar_lea.vmem [#allocation5], %s772
        %v774 = vld [vmem:[%s773] sm:$0x1]
        %775 = vst [vmem:[#allocation2 + $0x2b] sm:$0x1] %v774
        %s776 = sadd.s32 %s380, 44
        %s777 = sld [smem:[#allocation4 + %s776]]
        %p778 = scmp.gt.s32.totalorder %s777, 0
        %s779 = scalar_select %p778, %s777, 0
        %p780 = scmp.lt.s32.totalorder %s779, 511
        %s781 = scalar_select %p780, %s779, 511
        %s782 = scalar_lea.vmem [#allocation5], %s781
        %v783 = vld [vmem:[%s782] sm:$0x1]
        %784 = vst [vmem:[#allocation2 + $0x2c] sm:$0x1] %v783
        %s785 = sadd.s32 %s380, 45
        %s786 = sld [smem:[#allocation4 + %s785]]
        %p787 = scmp.gt.s32.totalorder %s786, 0
        %s788 = scalar_select %p787, %s786, 0
        %p789 = scmp.lt.s32.totalorder %s788, 511
        %s790 = scalar_select %p789, %s788, 511
        %s791 = scalar_lea.vmem [#allocation5], %s790
        %v792 = vld [vmem:[%s791] sm:$0x1]
        %793 = vst [vmem:[#allocation2 + $0x2d] sm:$0x1] %v792
        %s794 = sadd.s32 %s380, 46
        %s795 = sld [smem:[#allocation4 + %s794]]
        %p796 = scmp.gt.s32.totalorder %s795, 0
        %s797 = scalar_select %p796, %s795, 0
        %p798 = scmp.lt.s32.totalorder %s797, 511
        %s799 = scalar_select %p798, %s797, 511
        %s800 = scalar_lea.vmem [#allocation5], %s799
        %v801 = vld [vmem:[%s800] sm:$0x1]
        %802 = vst [vmem:[#allocation2 + $0x2e] sm:$0x1] %v801
        %s803 = sadd.s32 %s380, 47
        %s804 = sld [smem:[#allocation4 + %s803]]
        %p805 = scmp.gt.s32.totalorder %s804, 0
        %s806 = scalar_select %p805, %s804, 0
        %p807 = scmp.lt.s32.totalorder %s806, 511
        %s808 = scalar_select %p807, %s806, 511
        %s809 = scalar_lea.vmem [#allocation5], %s808
        %v810 = vld [vmem:[%s809] sm:$0x1]
        %811 = vst [vmem:[#allocation2 + $0x2f] sm:$0x1] %v810
        %s812 = sadd.s32 %s380, 48
        %s813 = sld [smem:[#allocation4 + %s812]]
        %p814 = scmp.gt.s32.totalorder %s813, 0
        %s815 = scalar_select %p814, %s813, 0
        %p816 = scmp.lt.s32.totalorder %s815, 511
        %s817 = scalar_select %p816, %s815, 511
        %s818 = scalar_lea.vmem [#allocation5], %s817
        %v819 = vld [vmem:[%s818] sm:$0x1]
        %820 = vst [vmem:[#allocation2 + $0x30] sm:$0x1] %v819
        %s821 = sadd.s32 %s380, 49
        %s822 = sld [smem:[#allocation4 + %s821]]
        %p823 = scmp.gt.s32.totalorder %s822, 0
        %s824 = scalar_select %p823, %s822, 0
        %p825 = scmp.lt.s32.totalorder %s824, 511
        %s826 = scalar_select %p825, %s824, 511
        %s827 = scalar_lea.vmem [#allocation5], %s826
        %v828 = vld [vmem:[%s827] sm:$0x1]
        %829 = vst [vmem:[#allocation2 + $0x31] sm:$0x1] %v828
        %s830 = sadd.s32 %s380, 50
        %s831 = sld [smem:[#allocation4 + %s830]]
        %p832 = scmp.gt.s32.totalorder %s831, 0
        %s833 = scalar_select %p832, %s831, 0
        %p834 = scmp.lt.s32.totalorder %s833, 511
        %s835 = scalar_select %p834, %s833, 511
        %s836 = scalar_lea.vmem [#allocation5], %s835
        %v837 = vld [vmem:[%s836] sm:$0x1]
        %838 = vst [vmem:[#allocation2 + $0x32] sm:$0x1] %v837
        %s839 = sadd.s32 %s380, 51
        %s840 = sld [smem:[#allocation4 + %s839]]
        %p841 = scmp.gt.s32.totalorder %s840, 0
        %s842 = scalar_select %p841, %s840, 0
        %p843 = scmp.lt.s32.totalorder %s842, 511
        %s844 = scalar_select %p843, %s842, 511
        %s845 = scalar_lea.vmem [#allocation5], %s844
        %v846 = vld [vmem:[%s845] sm:$0x1]
        %847 = vst [vmem:[#allocation2 + $0x33] sm:$0x1] %v846
        %s848 = sadd.s32 %s380, 52
        %s849 = sld [smem:[#allocation4 + %s848]]
        %p850 = scmp.gt.s32.totalorder %s849, 0
        %s851 = scalar_select %p850, %s849, 0
        %p852 = scmp.lt.s32.totalorder %s851, 511
        %s853 = scalar_select %p852, %s851, 511
        %s854 = scalar_lea.vmem [#allocation5], %s853
        %v855 = vld [vmem:[%s854] sm:$0x1]
        %856 = vst [vmem:[#allocation2 + $0x34] sm:$0x1] %v855
        %s857 = sadd.s32 %s380, 53
        %s858 = sld [smem:[#allocation4 + %s857]]
        %p859 = scmp.gt.s32.totalorder %s858, 0
        %s860 = scalar_select %p859, %s858, 0
        %p861 = scmp.lt.s32.totalorder %s860, 511
        %s862 = scalar_select %p861, %s860, 511
        %s863 = scalar_lea.vmem [#allocation5], %s862
        %v864 = vld [vmem:[%s863] sm:$0x1]
        %865 = vst [vmem:[#allocation2 + $0x35] sm:$0x1] %v864
        %s866 = sadd.s32 %s380, 54
        %s867 = sld [smem:[#allocation4 + %s866]]
        %p868 = scmp.gt.s32.totalorder %s867, 0
        %s869 = scalar_select %p868, %s867, 0
        %p870 = scmp.lt.s32.totalorder %s869, 511
        %s871 = scalar_select %p870, %s869, 511
        %s872 = scalar_lea.vmem [#allocation5], %s871
        %v873 = vld [vmem:[%s872] sm:$0x1]
        %874 = vst [vmem:[#allocation2 + $0x36] sm:$0x1] %v873
        %s875 = sadd.s32 %s380, 55
        %s876 = sld [smem:[#allocation4 + %s875]]
        %p877 = scmp.gt.s32.totalorder %s876, 0
        %s878 = scalar_select %p877, %s876, 0
        %p879 = scmp.lt.s32.totalorder %s878, 511
        %s880 = scalar_select %p879, %s878, 511
        %s881 = scalar_lea.vmem [#allocation5], %s880
        %v882 = vld [vmem:[%s881] sm:$0x1]
        %883 = vst [vmem:[#allocation2 + $0x37] sm:$0x1] %v882
        %s884 = sadd.s32 %s380, 56
        %s885 = sld [smem:[#allocation4 + %s884]]
        %p886 = scmp.gt.s32.totalorder %s885, 0
        %s887 = scalar_select %p886, %s885, 0
        %p888 = scmp.lt.s32.totalorder %s887, 511
        %s889 = scalar_select %p888, %s887, 511
        %s890 = scalar_lea.vmem [#allocation5], %s889
        %v891 = vld [vmem:[%s890] sm:$0x1]
        %892 = vst [vmem:[#allocation2 + $0x38] sm:$0x1] %v891
        %s893 = sadd.s32 %s380, 57
        %s894 = sld [smem:[#allocation4 + %s893]]
        %p895 = scmp.gt.s32.totalorder %s894, 0
        %s896 = scalar_select %p895, %s894, 0
        %p897 = scmp.lt.s32.totalorder %s896, 511
        %s898 = scalar_select %p897, %s896, 511
        %s899 = scalar_lea.vmem [#allocation5], %s898
        %v900 = vld [vmem:[%s899] sm:$0x1]
        %901 = vst [vmem:[#allocation2 + $0x39] sm:$0x1] %v900
        %s902 = sadd.s32 %s380, 58
        %s903 = sld [smem:[#allocation4 + %s902]]
        %p904 = scmp.gt.s32.totalorder %s903, 0
        %s905 = scalar_select %p904, %s903, 0
        %p906 = scmp.lt.s32.totalorder %s905, 511
        %s907 = scalar_select %p906, %s905, 511
        %s908 = scalar_lea.vmem [#allocation5], %s907
        %v909 = vld [vmem:[%s908] sm:$0x1]
        %910 = vst [vmem:[#allocation2 + $0x3a] sm:$0x1] %v909
        %s911 = sadd.s32 %s380, 59
        %s912 = sld [smem:[#allocation4 + %s911]]
        %p913 = scmp.gt.s32.totalorder %s912, 0
        %s914 = scalar_select %p913, %s912, 0
        %p915 = scmp.lt.s32.totalorder %s914, 511
        %s916 = scalar_select %p915, %s914, 511
        %s917 = scalar_lea.vmem [#allocation5], %s916
        %v918 = vld [vmem:[%s917] sm:$0x1]
        %919 = vst [vmem:[#allocation2 + $0x3b] sm:$0x1] %v918
        %s920 = sadd.s32 %s380, 60
        %s921 = sld [smem:[#allocation4 + %s920]]
        %p922 = scmp.gt.s32.totalorder %s921, 0
        %s923 = scalar_select %p922, %s921, 0
        %p924 = scmp.lt.s32.totalorder %s923, 511
        %s925 = scalar_select %p924, %s923, 511
        %s926 = scalar_lea.vmem [#allocation5], %s925
        %v927 = vld [vmem:[%s926] sm:$0x1]
        %928 = vst [vmem:[#allocation2 + $0x3c] sm:$0x1] %v927
        %s929 = sadd.s32 %s380, 61
        %s930 = sld [smem:[#allocation4 + %s929]]
        %p931 = scmp.gt.s32.totalorder %s930, 0
        %s932 = scalar_select %p931, %s930, 0
        %p933 = scmp.lt.s32.totalorder %s932, 511
        %s934 = scalar_select %p933, %s932, 511
        %s935 = scalar_lea.vmem [#allocation5], %s934
        %v936 = vld [vmem:[%s935] sm:$0x1]
        %937 = vst [vmem:[#allocation2 + $0x3d] sm:$0x1] %v936
        %s938 = sadd.s32 %s380, 62
        %s939 = sld [smem:[#allocation4 + %s938]]
        %p940 = scmp.gt.s32.totalorder %s939, 0
        %s941 = scalar_select %p940, %s939, 0
        %p942 = scmp.lt.s32.totalorder %s941, 511
        %s943 = scalar_select %p942, %s941, 511
        %s944 = scalar_lea.vmem [#allocation5], %s943
        %v945 = vld [vmem:[%s944] sm:$0x1]
        %946 = vst [vmem:[#allocation2 + $0x3e] sm:$0x1] %v945
        %s947 = sadd.s32 %s380, 63
        %s948 = sld [smem:[#allocation4 + %s947]]
        %p949 = scmp.gt.s32.totalorder %s948, 0
        %s950 = scalar_select %p949, %s948, 0
        %p951 = scmp.lt.s32.totalorder %s950, 511
        %s952 = scalar_select %p951, %s950, 511
        %s953 = scalar_lea.vmem [#allocation5], %s952
        %v954 = vld [vmem:[%s953] sm:$0x1]
        %955 = vst [vmem:[#allocation2 + $0x3f] sm:$0x1] %v954
        %v956 = vld [vmem:[#allocation2] sm:$0xff]
        %v957 = vld [vmem:[#allocation2 + $0x8] sm:$0xff]
        %v958 = vld [vmem:[#allocation2 + $0x10] sm:$0xff]
        %v959 = vld [vmem:[#allocation2 + $0x18] sm:$0xff]
        %v960 = vld [vmem:[#allocation2 + $0x20] sm:$0xff]
        %v961 = vld [vmem:[#allocation2 + $0x28] sm:$0xff]
        %v962 = vld [vmem:[#allocation2 + $0x30] sm:$0xff]
        %v963 = vld [vmem:[#allocation2 + $0x38] sm:$0xff]
        %v964 = vld [vmem:[#allocation13] sm:$0x1]
        %v965 = vld [vmem:[#allocation14] sm:$0x1]
        %966 = vadd.xlane.f32.xlu0 %v956
        %v967 = vpop.xlane.xlu0 %966
        %968 = vadd.xlane.f32.xlu0 %v957
        %v969 = vpop.xlane.xlu0 %968
        %970 = vadd.xlane.f32.xlu0 %v958
        %v971 = vpop.xlane.xlu0 %970
        %972 = vadd.xlane.f32.xlu0 %v959
        %v973 = vpop.xlane.xlu0 %972
        %974 = vadd.xlane.f32.xlu0 %v960
        %v975 = vpop.xlane.xlu0 %974
        %976 = vadd.xlane.f32.xlu0 %v961
        %v977 = vpop.xlane.xlu0 %976
        %978 = vadd.xlane.f32.xlu0 %v962
        %v979 = vpop.xlane.xlu0 %978
        %980 = vadd.xlane.f32.xlu0 %v963
        %v981 = vpop.xlane.xlu0 %980
        %v982 = vrcp.pop 128.0
        %v983 = vmul.f32 %v967, %v982
        %v984 = vmul.f32 %v969, %v982
        %v985 = vmul.f32 %v971, %v982
        %v986 = vmul.f32 %v973, %v982
        %v987 = vmul.f32 %v975, %v982
        %v988 = vmul.f32 %v977, %v982
        %v989 = vmul.f32 %v979, %v982
        %v990 = vmul.f32 %v981, %v982
        %v991 = vsub.f32 %v956, %v983
        %v992 = vsub.f32 %v957, %v984
        %v993 = vsub.f32 %v958, %v985
        %v994 = vsub.f32 %v959, %v986
        %v995 = vsub.f32 %v960, %v987
        %v996 = vsub.f32 %v961, %v988
        %v997 = vsub.f32 %v962, %v989
        %v998 = vsub.f32 %v963, %v990
        %v999 = vmul.f32 %v991, %v991
        %v1000 = vmul.f32 %v992, %v992
        %v1001 = vmul.f32 %v993, %v993
        %v1002 = vmul.f32 %v994, %v994
        %v1003 = vmul.f32 %v995, %v995
        %v1004 = vmul.f32 %v996, %v996
        %v1005 = vmul.f32 %v997, %v997
        %v1006 = vmul.f32 %v998, %v998
        %1007 = vadd.xlane.f32.xlu0 %v999
        %v1008 = vpop.xlane.xlu0 %1007
        %1009 = vadd.xlane.f32.xlu0 %v1000
        %v1010 = vpop.xlane.xlu0 %1009
        %1011 = vadd.xlane.f32.xlu0 %v1001
        %v1012 = vpop.xlane.xlu0 %1011
        %1013 = vadd.xlane.f32.xlu0 %v1002
        %v1014 = vpop.xlane.xlu0 %1013
        %1015 = vadd.xlane.f32.xlu0 %v1003
        %v1016 = vpop.xlane.xlu0 %1015
        %1017 = vadd.xlane.f32.xlu0 %v1004
        %v1018 = vpop.xlane.xlu0 %1017
        %1019 = vadd.xlane.f32.xlu0 %v1005
        %v1020 = vpop.xlane.xlu0 %1019
        %1021 = vadd.xlane.f32.xlu0 %v1006
        %v1022 = vpop.xlane.xlu0 %1021
        %v1023 = vmul.f32 %v1008, %v982
        %v1024 = vmul.f32 %v1010, %v982
        %v1025 = vmul.f32 %v1012, %v982
        %v1026 = vmul.f32 %v1014, %v982
        %v1027 = vmul.f32 %v1016, %v982
        %v1028 = vmul.f32 %v1018, %v982
        %v1029 = vmul.f32 %v1020, %v982
        %v1030 = vmul.f32 %v1022, %v982
        %v1031 = vadd.f32 %v1023, 1e-05
        %v1032 = vadd.f32 %v1024, 1e-05
        %v1033 = vadd.f32 %v1025, 1e-05
        %v1034 = vadd.f32 %v1026, 1e-05
        %v1035 = vadd.f32 %v1027, 1e-05
        %v1036 = vadd.f32 %v1028, 1e-05
        %v1037 = vadd.f32 %v1029, 1e-05
        %v1038 = vadd.f32 %v1030, 1e-05
        %v1039 = vrsqrt.pop %v1031
        %v1040 = vrsqrt.pop %v1032
        %v1041 = vrsqrt.pop %v1033
        %v1042 = vrsqrt.pop %v1034
        %v1043 = vrsqrt.pop %v1035
        %v1044 = vrsqrt.pop %v1036
        %v1045 = vrsqrt.pop %v1037
        %v1046 = vrsqrt.pop %v1038
        %v1047 = vmul.f32 %v991, %v1039
        %v1048 = vmul.f32 %v992, %v1040
        %v1049 = vmul.f32 %v993, %v1041
        %v1050 = vmul.f32 %v994, %v1042
        %v1051 = vmul.f32 %v995, %v1043
        %v1052 = vmul.f32 %v996, %v1044
        %v1053 = vmul.f32 %v997, %v1045
        %v1054 = vmul.f32 %v998, %v1046
        %v1056 = vlaneseq
        %v1057 = vshrl.u32 %v1056, 7
        %v1058 = vsub.s32 0, %v1057
        %v1059 = vrot.slane %v964, %v1058
        %v1061 = vmul.f32 %v1047, %v1059
        %v1062 = vmul.f32 %v1048, %v1059
        %v1063 = vmul.f32 %v1049, %v1059
        %v1064 = vmul.f32 %v1050, %v1059
        %v1065 = vmul.f32 %v1051, %v1059
        %v1066 = vmul.f32 %v1052, %v1059
        %v1067 = vmul.f32 %v1053, %v1059
        %v1068 = vmul.f32 %v1054, %v1059
        %v1070 = vlaneseq
        %v1071 = vshrl.u32 %v1070, 7
        %v1072 = vsub.s32 0, %v1071
        %v1073 = vrot.slane %v965, %v1072
        %v1075 = vadd.f32 %v1061, %v1073
        %v1076 = vadd.f32 %v1062, %v1073
        %v1077 = vadd.f32 %v1063, %v1073
        %v1078 = vadd.f32 %v1064, %v1073
        %v1079 = vadd.f32 %v1065, %v1073
        %v1080 = vadd.f32 %v1066, %v1073
        %v1081 = vadd.f32 %v1067, %v1073
        %v1082 = vadd.f32 %v1068, %v1073
        %v1083 = vpack.c.bf16 %v1076, %v1075
        %v1084 = vpack.c.bf16 %v1078, %v1077
        %v1085 = vpack.c.bf16 %v1080, %v1079
        %v1086 = vpack.c.bf16 %v1082, %v1081
        %v1087 = vld [vmem:[#allocation16] sm:$0xf]
        %v1088 = vld [vmem:[#allocation16 + $0x4] sm:$0xf]
        %v1089 = vld [vmem:[#allocation16 + $0x8] sm:$0xf]
        %v1090 = vld [vmem:[#allocation16 + $0xc] sm:$0xf]
        %v1091 = vld [vmem:[#allocation16 + $0x10] sm:$0xf]
        %v1092 = vld [vmem:[#allocation16 + $0x14] sm:$0xf]
        %v1093 = vld [vmem:[#allocation16 + $0x18] sm:$0xf]
        %v1094 = vld [vmem:[#allocation16 + $0x1c] sm:$0xf]
        %v1095 = vld [vmem:[#allocation16 + $0x20] sm:$0xf]
        %v1096 = vld [vmem:[#allocation16 + $0x24] sm:$0xf]
        %v1097 = vld [vmem:[#allocation16 + $0x28] sm:$0xf]
        %v1098 = vld [vmem:[#allocation16 + $0x2c] sm:$0xf]
        %v1099 = vld [vmem:[#allocation16 + $0x30] sm:$0xf]
        %v1100 = vld [vmem:[#allocation16 + $0x34] sm:$0xf]
        %v1101 = vld [vmem:[#allocation16 + $0x38] sm:$0xf]
        %v1102 = vld [vmem:[#allocation16 + $0x3c] sm:$0xf]
        %v1119 = vunpack.c.l.b16 %v1087
        %v1120 = vunpack.c.l.b16 %v1088
        %v1121 = vunpack.c.l.b16 %v1089
        %v1122 = vunpack.c.l.b16 %v1090
        %v1123 = vunpack.c.l.b16 %v1091
        %v1124 = vunpack.c.l.b16 %v1092
        %v1125 = vunpack.c.l.b16 %v1093
        %v1126 = vunpack.c.l.b16 %v1094
        %v1127 = vunpack.c.l.b16 %v1095
        %v1128 = vunpack.c.l.b16 %v1096
        %v1129 = vunpack.c.l.b16 %v1097
        %v1130 = vunpack.c.l.b16 %v1098
        %v1131 = vunpack.c.l.b16 %v1099
        %v1132 = vunpack.c.l.b16 %v1100
        %v1133 = vunpack.c.l.b16 %v1101
        %v1134 = vunpack.c.l.b16 %v1102
        %v1135 = vpack.c.b16 %v1120, %v1119
        %v1136 = vpack.c.b16 %v1122, %v1121
        %v1137 = vpack.c.b16 %v1124, %v1123
        %v1138 = vpack.c.b16 %v1126, %v1125
        %v1139 = vpack.c.b16 %v1128, %v1127
        %v1140 = vpack.c.b16 %v1130, %v1129
        %v1141 = vpack.c.b16 %v1132, %v1131
        %v1142 = vpack.c.b16 %v1134, %v1133
        %1151 = vmatprep.subr.bf16.mxu0 0
        %1152 = vmatpush1.bf16.msra.mxu0 %v1135
        %1153 = vmatprep.subr.bf16.mxu0 0
        %1154 = vmatpush1.bf16.msra.mxu0 %v1136
        %1155 = vmatprep.subr.bf16.mxu0 0
        %1156 = vmatpush1.bf16.msra.mxu0 %v1137
        %1157 = vmatprep.subr.bf16.mxu0 0
        %1158 = vmatpush1.bf16.msra.mxu0 %v1138
        %1159 = vmatprep.subr.bf16.mxu0 0
        %1160 = vmatpush1.bf16.msra.mxu0 %v1139
        %1161 = vmatprep.subr.bf16.mxu0 0
        %1162 = vmatpush1.bf16.msra.mxu0 %v1140
        %1163 = vmatprep.subr.bf16.mxu0 0
        %1164 = vmatpush1.bf16.msra.mxu0 %v1141
        %1165 = vmatprep.subr.bf16.mxu0 0
        %1166 = vmatpush1.bf16.msra.mxu0 %v1142
        %1167 = vmatprep.subr.bf16.mxu0 0
        %1168 = vmatpush1.bf16.msra.mxu0 0
        %1169 = vmatprep.subr.bf16.mxu0 0
        %1170 = vmatpush1.bf16.msra.mxu0 0
        %1171 = vmatprep.subr.bf16.mxu0 0
        %1172 = vmatpush1.bf16.msra.mxu0 0
        %1173 = vmatprep.subr.bf16.mxu0 0
        %1174 = vmatpush1.bf16.msra.mxu0 0
        %1175 = vmatprep.subr.bf16.mxu0 0
        %1176 = vmatpush1.bf16.msra.mxu0 0
        %1177 = vmatprep.subr.bf16.mxu0 0
        %1178 = vmatpush1.bf16.msra.mxu0 0
        %1179 = vmatprep.subr.bf16.mxu0 0
        %1180 = vmatpush1.bf16.msra.mxu0 0
        %1181 = vmatprep.subr.bf16.mxu0 0
        %1182 = vmatpush1.bf16.msra.mxu0 0
        %1183 = vmatprep.mubr.bf16.mxu0 0
        %1184 = vmatmul.mubr.bf16.gmra.mrb[0].mxu0 %v1083
        %v1185 = vpop.f32.mrb[0].mxu0
        %v1186 = vadd.f32 0.0, %v1185
        %v1187 = vpop.f32.mrb[0].mxu0
        %v1188 = vpop.f32.mrb[0].mxu0
        %v1189 = vadd.f32 0.0, %v1188
        %v1190 = vpop.f32.mrb[0].mxu0
        %1191 = vmatprep.mubr.bf16.mxu0 0
        %1192 = vmatmul.mubr.bf16.gmra.mrb[0].mxu0 %v1084
        %v1193 = vpop.f32.mrb[0].mxu0
        %v1194 = vadd.f32 0.0, %v1193
        %v1195 = vpop.f32.mrb[0].mxu0
        %v1196 = vpop.f32.mrb[0].mxu0
        %v1197 = vadd.f32 0.0, %v1196
        %v1198 = vpop.f32.mrb[0].mxu0
        %1199 = vmatprep.mubr.bf16.mxu0 0
        %1200 = vmatmul.mubr.bf16.gmra.mrb[0].mxu0 %v1085
        %v1201 = vpop.f32.mrb[0].mxu0
        %v1202 = vadd.f32 0.0, %v1201
        %v1203 = vpop.f32.mrb[0].mxu0
        %v1204 = vpop.f32.mrb[0].mxu0
        %v1205 = vadd.f32 0.0, %v1204
        %v1206 = vpop.f32.mrb[0].mxu0
        %1207 = vmatprep.mubr.bf16.mxu0 0
        %1208 = vmatmul.mubr.bf16.gmra.mrb[0].mxu0 %v1086
        %v1209 = vpop.f32.mrb[0].mxu0
        %v1210 = vadd.f32 0.0, %v1209
        %v1211 = vpop.f32.mrb[0].mxu0
        %v1212 = vpop.f32.mrb[0].mxu0
        %v1213 = vadd.f32 0.0, %v1212
        %v1214 = vpop.f32.mrb[0].mxu0
        %1215 = vdwg.mxu0
        %v1216 = vld [vmem:[%s327] sm:$0xff]
        %v1217 = vlaneseq
        %v1218 = vshrl.u32 %v1217, 7
        %v1219 = vsub.s32 0, %v1218
        %v1220 = vrot.slane %v1216, %v1219
        %1222 = vbcast.lane.b32.xlu0 %v1220, 256
        %v1223 = vpop.permute.xlu0 %1222
        %v1224 = vlaneseq
        %v1225 = vshrl.u32 %v1224, 7
        %v1226 = vsub.s32 1, %v1225
        %v1227 = vrot.slane %v1216, %v1226
        %1229 = vbcast.lane.b32.xlu0 %v1227, 256
        %v1230 = vpop.permute.xlu0 %1229
        %v1231 = vlaneseq
        %v1232 = vshrl.u32 %v1231, 7
        %v1233 = vsub.s32 2, %v1232
        %v1234 = vrot.slane %v1216, %v1233
        %1236 = vbcast.lane.b32.xlu0 %v1234, 256
        %v1237 = vpop.permute.xlu0 %1236
        %v1238 = vlaneseq
        %v1239 = vshrl.u32 %v1238, 7
        %v1240 = vsub.s32 3, %v1239
        %v1241 = vrot.slane %v1216, %v1240
        %1243 = vbcast.lane.b32.xlu0 %v1241, 256
        %v1244 = vpop.permute.xlu0 %1243
        %v1245 = vlaneseq
        %v1246 = vshrl.u32 %v1245, 7
        %v1247 = vsub.s32 4, %v1246
        %v1248 = vrot.slane %v1216, %v1247
        %1250 = vbcast.lane.b32.xlu0 %v1248, 256
        %v1251 = vpop.permute.xlu0 %1250
        %v1252 = vlaneseq
        %v1253 = vshrl.u32 %v1252, 7
        %v1254 = vsub.s32 5, %v1253
        %v1255 = vrot.slane %v1216, %v1254
        %1257 = vbcast.lane.b32.xlu0 %v1255, 256
        %v1258 = vpop.permute.xlu0 %1257
        %v1259 = vlaneseq
        %v1260 = vshrl.u32 %v1259, 7
        %v1261 = vsub.s32 6, %v1260
        %v1262 = vrot.slane %v1216, %v1261
        %1264 = vbcast.lane.b32.xlu0 %v1262, 256
        %v1265 = vpop.permute.xlu0 %1264
        %v1266 = vlaneseq
        %v1267 = vshrl.u32 %v1266, 7
        %v1268 = vsub.s32 7, %v1267
        %v1269 = vrot.slane %v1216, %v1268
        %1271 = vbcast.lane.b32.xlu0 %v1269, 256
        %v1272 = vpop.permute.xlu0 %1271
        %v1273 = vld [vmem:[#allocation10] sm:$0xf]
        %v1274 = vmul.f32 %v1223, %v1273
        %v1275 = vmul.f32 %v1230, %v1273
        %v1276 = vmul.f32 %v1237, %v1273
        %v1277 = vmul.f32 %v1244, %v1273
        %v1278 = vmul.f32 %v1251, %v1273
        %v1279 = vmul.f32 %v1258, %v1273
        %v1280 = vmul.f32 %v1265, %v1273
        %v1281 = vmul.f32 %v1272, %v1273
        %v1282 = vld [vmem:[#allocation11] sm:$0x1]
        %v1284 = vlaneseq
        %v1285 = vshrl.u32 %v1284, 7
        %v1286 = vsub.s32 0, %v1285
        %v1287 = vrot.slane %v1282, %v1286
        %v1289 = vadd.f32 %v1274, %v1287
        %v1290 = vadd.f32 %v1275, %v1287
        %v1291 = vadd.f32 %v1276, %v1287
        %v1292 = vadd.f32 %v1277, %v1287
        %v1293 = vadd.f32 %v1278, %v1287
        %v1294 = vadd.f32 %v1279, %v1287
        %v1295 = vadd.f32 %v1280, %v1287
        %v1296 = vadd.f32 %v1281, %v1287
        %v1305 = vrot.slane %v1186, 4
        %v1306 = vrot.slane %v1189, 4
        %v1307 = vrot.slane %v1194, 4
        %v1308 = vrot.slane %v1197, 4
        %v1309 = vrot.slane %v1202, 4
        %v1310 = vrot.slane %v1205, 4
        %v1311 = vrot.slane %v1210, 4
        %v1312 = vrot.slane %v1213, 4
        %vm1321 = vcmask 1043456
        %v1322 = vsel %vm1321, %v1289, %v1305
        %v1323 = vsel %vm1321, %v1290, %v1306
        %v1324 = vsel %vm1321, %v1291, %v1307
        %v1325 = vsel %vm1321, %v1292, %v1308
        %v1326 = vsel %vm1321, %v1293, %v1309
        %v1327 = vsel %vm1321, %v1294, %v1310
        %v1328 = vsel %vm1321, %v1295, %v1311
        %v1329 = vsel %vm1321, %v1296, %v1312
        %1330 = vst [vmem:[%s377] sm:$0xff] %v1322
        %1331 = vst [vmem:[%s377 + $0x8] sm:$0xf] %v1305
        %1332 = vst [vmem:[%s377 + $0x10] sm:$0xff] %v1323
        %1333 = vst [vmem:[%s377 + $0x18] sm:$0xf] %v1306
        %1334 = vst [vmem:[%s377 + $0x20] sm:$0xff] %v1324
        %1335 = vst [vmem:[%s377 + $0x28] sm:$0xf] %v1307
        %1336 = vst [vmem:[%s377 + $0x30] sm:$0xff] %v1325
        %1337 = vst [vmem:[%s377 + $0x38] sm:$0xf] %v1308
        %1338 = vst [vmem:[%s377 + $0x40] sm:$0xff] %v1326
        %1339 = vst [vmem:[%s377 + $0x48] sm:$0xf] %v1309
        %1340 = vst [vmem:[%s377 + $0x50] sm:$0xff] %v1327
        %1341 = vst [vmem:[%s377 + $0x58] sm:$0xf] %v1310
        %1342 = vst [vmem:[%s377 + $0x60] sm:$0xff] %v1328
        %1343 = vst [vmem:[%s377 + $0x68] sm:$0xf] %v1311
        %1344 = vst [vmem:[%s377 + $0x70] sm:$0xff] %v1329
        %1345 = vst [vmem:[%s377 + $0x78] sm:$0xf] %v1312
        %s1346 = sand.u32 %s192, 1
        %s1347 = scalar_lea.sflag [#allocation7], %s1346
        %s1348 = sand.u32 %s192, 1
        %s1349 = smul.addr %s1348, 128
        %s1350 = scalar_lea.vmem [#allocation17], %s1349
        // Predicated region
        $region77: #{tpu_custom_call.1} parent=47 // pred_check
          %p1351 = pneg %p202
        $region78: #{tpu_custom_call.1} parent=47 // pred_check_branch
          %1353 = sbr.rel (%p1351) target = $region80
        $region79: #{tpu_custom_call.1} parent=47 // pred_region
          %s1354 = smul.u32 8, %s32
          %s1356 = ssub.s32 2048, 2048
          %1357 = vsyncadd %s1347, %s1356
          %s1358 = smul.addr %s1354, 2
          %s1359 = smul.addr %s1358, 128
          %s1360 = scalar_lea.hbm %s8, %s1359
          %s1361 = sshll.u32 %s1350, 4
          %s1362 = int_to_ptr.vmem [resolvable:$true] %s1361
          %1367 = dma.vmem_to_hbm [thread:$0]  %s1362, 2048, %s1360, %s1347, 128, 128, 8
        $region80: #{tpu_custom_call.1} parent=47 // pred_fallthru
          _
      $region48: #{tpu_custom_call.1} parent=5 // pred_fallthru
        _
      %p1368 = scmp.le.s32.totalorder 2, %s27
      // Predicated region
      $region81: #{tpu_custom_call.1} parent=5 // pred_check
        %p1369 = pneg %p1368
      $region82: #{tpu_custom_call.1} parent=5 // pred_check_branch
        %1371 = sbr.rel (%p1369) target = $region84
      $region83: #{tpu_custom_call.1} parent=5 // pred_region
        %s1372 = ssub.s32 %s27, 2
        // Predicated region
        $region85: #{tpu_custom_call.1} parent=83 // pred_check
          %p1373 = pneg %p208
        $region86: #{tpu_custom_call.1} parent=83 // pred_check_branch
          %1375 = sbr.rel (%p1373) target = $region88
        $region87: #{tpu_custom_call.1} parent=83 // pred_region
          %s1376 = sand.u32 %s193, 1
          %s1377 = scalar_lea.sflag [#allocation7], %s1376
          %s1378 = sand.u32 %s193, 1
          %s1379 = smul.addr %s1378, 128
          %s1380 = scalar_lea.vmem [#allocation17], %s1379
          %1381 = dma.done %s1377, 2048
        $region88: #{tpu_custom_call.1} parent=83 // pred_fallthru
          _
      $region84: #{tpu_custom_call.1} parent=5 // pred_fallthru
        _
    $region6: #{tpu_custom_call.1} parent=1 // loop_footer
      %s31 = sadd.s32 1, %s27
    $region7: #{tpu_custom_call.1} parent=1 // loop_footer_branch
      %26 = sbr.rel target = $region3
    $region8: #{tpu_custom_call.1} parent=1 // loop_exit
      _
    %1382 = vsyncpa [#allocation6], 1
    %s1383 = scalar_lea.sflag [#allocation6], 1
    %1384 = vsyncpa %s1383, 1
    %1385 = vsyncpa [#allocation9], 1
    %s1386 = scalar_lea.sflag [#allocation9], 1
    %1387 = vsyncpa %s1386, 1
    %1388 = vsyncpa [#allocation12], 1
    %1389 = vsyncpa [#allocation15], 1
    %1390 = vsyncpa [#allocation7], 1
    %s1391 = scalar_lea.sflag [#allocation7], 1
    %1392 = vsyncpa %s1391, 1

</llo_original>
